<compile_context>
chip_gen: v7x
topology: tpu7x:2x2x1
jax: 0.10.0
libtpu: 0.0.40
codegen_flags: <defaults>
</compile_context>

<pallas_src>
import functools
import math

import jax
import jax.numpy as jnp
from jax import lax
from jax.experimental import pallas as pl
from jax.experimental.pallas import tpu as pltpu

LN_EPS = 1e-5


def _imha_kernel(h_ref, wq_ref, bq_ref, wk_ref, bk_ref, wv_ref, bv_ref,
                 wo_ref, bo_ref, g_ref, bt_ref, *rest,
                 num_heads, d_k, d_v, store_attn):
    # h_ref   : (1, TB, L, D)      current mechanism's batch-tile
    # wq/wk   : (1, D, H*d_k)      bq/bk : (1, 1, H*d_k)
    # wv      : (1, D, H*d_v)      bv    : (1, 1, H*d_v)
    # wo      : (1, H*d_v, D)      bo    : (1, 1, D)
    # g, bt   : (1, D)             shared LayerNorm affine
    # rest    : o_ref (1, TB, L, D) [, attn_ref (H, TB, L, L)] , ctx_scr (TB*L, H*d_v)
    if store_attn:
        o_ref, attn_ref, ctx_scr = rest
    else:
        o_ref, ctx_scr = rest
        attn_ref = None

    _, TB, L, D = h_ref.shape
    dt = h_ref.dtype

    xf = h_ref[0].reshape(TB * L, D)                  # MXU M-dim = TB*L

    inv_temp = 1.0 / math.sqrt(float(d_k))

    # Fused QKV projections (all heads in one wide matmul each); f32 accumulation.
    # 1/sqrt(d_k) is folded into q here (one multiply) instead of scaling scores.
    q = ((jnp.dot(xf, wq_ref[0], preferred_element_type=jnp.float32)
          + bq_ref[0].astype(jnp.float32)) * inv_temp).astype(dt)   # (TB*L, H*d_k)
    k = (jnp.dot(xf, wk_ref[0], preferred_element_type=jnp.float32)
         + bk_ref[0].astype(jnp.float32)).astype(dt)                # (TB*L, H*d_k)
    v = (jnp.dot(xf, wv_ref[0], preferred_element_type=jnp.float32)
         + bv_ref[0].astype(jnp.float32)).astype(dt)                # (TB*L, H*d_v)

    for head in range(num_heads):                     # static, small H
        q_h = q[:, head * d_k:(head + 1) * d_k].reshape(TB, L, d_k)
        k_h = k[:, head * d_k:(head + 1) * d_k].reshape(TB, L, d_k)
        v_h = v[:, head * d_v:(head + 1) * d_v].reshape(TB, L, d_v)

        # scores + stable softmax in f32 (post-softmax dropout is identity in eval)
        s = jnp.einsum('bld,bmd->blm', q_h, k_h,
                       preferred_element_type=jnp.float32)          # (TB, L, L)
        s = s - jnp.max(s, axis=-1, keepdims=True)
        p = jnp.exp(s)
        # divide -> EUP approximate reciprocal + VPU multiply
        p = p * pl.reciprocal(jnp.sum(p, axis=-1, keepdims=True), approx=True)

        if store_attn:
            attn_ref[head, :, :, :] = p.astype(attn_ref.dtype)

        ctx_h = jnp.einsum('blm,bmd->bld', p.astype(dt), v_h,
                           preferred_element_type=jnp.float32)      # (TB, L, d_v)
        # stream this head's context into the VMEM slab (no list / concatenate)
        ctx_scr[:, head * d_v:(head + 1) * d_v] = (
            ctx_h.reshape(TB * L, d_v).astype(ctx_scr.dtype))

    # fused output projection (K = H*d_v), f32 accumulation
    m = (jnp.dot(ctx_scr[...], wo_ref[0], preferred_element_type=jnp.float32)
         + bo_ref[0].astype(jnp.float32))                           # (TB*L, D)

    # residual + shared LayerNorm (biased variance, eps=1e-5), all in f32
    y = m + xf.astype(jnp.float32)
    mean = jnp.mean(y, axis=-1, keepdims=True)
    cen = y - mean
    var = jnp.mean(cen * cen, axis=-1, keepdims=True)
    out = cen * lax.rsqrt(var + LN_EPS)
    out = out * g_ref[...].astype(jnp.float32) + bt_ref[...].astype(jnp.float32)

    o_ref[0] = out.reshape(TB, L, D).astype(o_ref.dtype)


@functools.partial(
    jax.jit,
    static_argnames=("num_heads", "d_k", "d_v", "batch_tile", "return_attn",
                     "single_buffer_weights", "vmem_limit_bytes", "mech_parallel"))
def _run_pallas(h, wq, bq, wk, bk, wv, bv, wo, bo, gamma, beta, *,
                num_heads, d_k, d_v, batch_tile, return_attn,
                single_buffer_weights, vmem_limit_bytes, mech_parallel):
    n_s, Bp, L, D = h.shape
    H = num_heads
    hdk = H * d_k
    hdv = H * d_v
    grid = (n_s, Bp // batch_tile)

    def wspec(shape, index_map):
        # Weights are invariant over the inner (batch) grid axis; on v7x keep a
        # single VMEM buffer for them (they only change at mechanism boundaries).
        if single_buffer_weights:
            return pl.BlockSpec(shape, index_map, pipeline_mode=pl.Buffered(1))
        return pl.BlockSpec(shape, index_map)

    in_specs = [
        pl.BlockSpec((1, batch_tile, L, D), lambda s, b: (s, b, 0, 0)),   # h
        wspec((1, D, hdk), lambda s, b: (s, 0, 0)),                       # wq
        wspec((1, 1, hdk), lambda s, b: (s, 0, 0)),                       # bq
        wspec((1, D, hdk), lambda s, b: (s, 0, 0)),                       # wk
        wspec((1, 1, hdk), lambda s, b: (s, 0, 0)),                       # bk
        wspec((1, D, hdv), lambda s, b: (s, 0, 0)),                       # wv
        wspec((1, 1, hdv), lambda s, b: (s, 0, 0)),                       # bv
        wspec((1, hdv, D), lambda s, b: (s, 0, 0)),                       # wo
        wspec((1, 1, D), lambda s, b: (s, 0, 0)),                         # bo
        wspec((1, D), lambda s, b: (0, 0)),                               # gamma (shared)
        wspec((1, D), lambda s, b: (0, 0)),                               # beta  (shared)
    ]

    out_spec_h = pl.BlockSpec((1, batch_tile, L, D), lambda s, b: (s, b, 0, 0))
    if return_attn:
        out_shape = (
            jax.ShapeDtypeStruct((n_s, Bp, L, D), h.dtype),        # normed output
            jax.ShapeDtypeStruct((n_s * H, Bp, L, L), h.dtype),    # attention probs
        )
        out_specs = [
            out_spec_h,
            pl.BlockSpec((H, batch_tile, L, L), lambda s, b: (s, b, 0, 0)),
        ]
    else:
        out_shape = (jax.ShapeDtypeStruct((n_s, Bp, L, D), h.dtype),)
        out_specs = [out_spec_h]

    # Put megacore parallelism on the mechanism axis so both v7x TensorCores do not
    # re-fetch every mechanism's weights; single-mechanism models split the batch.
    dim_sem = ("parallel", "arbitrary") if mech_parallel else ("arbitrary", "parallel")

    kernel = functools.partial(_imha_kernel, num_heads=H, d_k=d_k, d_v=d_v,
                               store_attn=return_attn)

    return pl.pallas_call(
        kernel,
        out_shape=out_shape,
        grid_spec=pltpu.PrefetchScalarGridSpec(
            num_scalar_prefetch=0,
            grid=grid,
            in_specs=in_specs,
            out_specs=out_specs,
            scratch_shapes=[pltpu.VMEM((batch_tile * L, hdv), h.dtype)],
        ),
        compiler_params=pltpu.CompilerParams(
            dimension_semantics=dim_sem,
            vmem_limit_bytes=int(vmem_limit_bytes),
        ),
    )(h, wq, bq, wk, bk, wv, bv, wo, bo, gamma, beta)


def _tpu_vmem_info():
    """(physical VMEM bytes, is_v7x) with conservative fallbacks."""
    vmem_bytes = 64 * 1024 * 1024          # conservative (v7x per-TensorCore)
    is_v7x = False
    try:
        info = pltpu.get_tpu_info()
        vmem_bytes = int(getattr(info, "vmem_capacity_bytes", vmem_bytes))
        is_v7x = "7" in str(getattr(info, "chip_version", ""))
    except Exception:
        pass
    return vmem_bytes, is_v7x


def _auto_batch_tile(B, L, D, H, hdk, hdv, esz, return_attn, budget_bytes,
                     weight_bufs):
    """Largest batch tile whose full per-step VMEM working set fits the budget."""
    # Tile-size-independent residency: all weights/biases/LN affine, per buffer copy.
    weight_bytes = esz * (2 * D * hdk + 2 * D * hdv + 2 * hdk + hdv + 3 * D)
    fixed = weight_bufs * weight_bytes
    # Per-batch-element bytes.
    per_b = 0
    per_b += 2 * L * D * esz                    # input tile (double buffered)
    per_b += 2 * L * D * esz                    # output tile (double buffered)
    if return_attn:
        per_b += 2 * H * L * L * esz            # attn-probs tile (double buffered)
    per_b += L * hdv * esz                      # ctx VMEM scratch
    per_b += 4 * L * (2 * hdk + hdv)            # q, k, v (f32)
    per_b += 4 * 2 * L * L                      # one head's scores + probs (f32)
    per_b += 4 * 3 * L * D                      # W0 out / residual / LN temps (f32)
    avail = max(budget_bytes - fixed, per_b)
    return max(1, int(avail // per_b))


def inter_mechanism_attention_sublayer(h, wq, bq, wk, bk, wv, bv, wo, bo,
                                       gamma, beta, *, num_heads,
                                       batch_tile=None, return_attn=True):
    """
    h      : (n_s, B, L, d_mech)
    wq/wk  : (n_s, d_mech, H*d_k)    bq/bk : (n_s, H*d_k)
    wv     : (n_s, d_mech, H*d_v)    bv    : (n_s, H*d_v)
    wo     : (n_s, H*d_v, d_mech)    bo    : (n_s, d_mech)
    gamma, beta : (d_mech,)          shared LayerNorm affine
    returns (out, attn): out (n_s, B, L, d_mech); attn (n_s, B, H, L, L) or None
    when return_attn=False (skips the large attention-probs HBM writeback).
    """
    n_s, B, L, D = h.shape
    H = num_heads
    hdk = wq.shape[-1]
    hdv = wv.shape[-1]
    d_k = hdk // H
    d_v = hdv // H
    esz = jnp.dtype(h.dtype).itemsize

    vmem_bytes, is_v7x = _tpu_vmem_info()
    # Explicit scoped-VMEM limit (v5e default is only 16 MiB; v7x physical is 64 MiB).
    vmem_limit = min(int(vmem_bytes * 3 // 4), 100 * 1024 * 1024)
    weight_bufs = 1 if is_v7x else 2

    if batch_tile is None:
        max_tile = _auto_batch_tile(B, L, D, H, hdk, hdv, esz, return_attn,
                                    vmem_limit, weight_bufs)
    else:
        max_tile = int(batch_tile)
    max_tile = max(1, min(max_tile, B))

    # Prefer a tile that divides B (avoids a full-tensor jnp.pad -> extra HBM copy);
    # pad only when no divisor comes close to the VMEM-optimal tile.
    if B % max_tile == 0:
        tile = max_tile
    else:
        div = max(d for d in range(1, max_tile + 1) if B % d == 0)
        tile = div if div * 2 >= max_tile else max_tile

    n_blk = pl.cdiv(B, tile)
    Bp = n_blk * tile
    h_in = h if Bp == B else jnp.pad(h, ((0, 0), (0, Bp - B), (0, 0), (0, 0)))

    args = (h_in,
            wq, bq.reshape(n_s, 1, hdk),
            wk, bk.reshape(n_s, 1, hdk),
            wv, bv.reshape(n_s, 1, hdv),
            wo, bo.reshape(n_s, 1, D),
            gamma.reshape(1, D), beta.reshape(1, D))
    kw = dict(num_heads=H, d_k=d_k, d_v=d_v, batch_tile=tile,
              return_attn=return_attn, vmem_limit_bytes=vmem_limit,
              mech_parallel=n_s > 1)

    try:
        res = _run_pallas(*args, single_buffer_weights=is_v7x, **kw)
    except Exception:
        if not is_v7x:
            raise
        # Fallback: default (double) buffering for the weights.
        res = _run_pallas(*args, single_buffer_weights=False, **kw)

    if return_attn:
        out_p, attn_p = res
    else:
        (out_p,) = res
        return out_p[:, :B], None

    out = out_p[:, :B]
    # Faithful to the torch module: attention is computed (head, batch)-major and
    # then `.view(batch, heads, L, L)` WITHOUT a transpose.
    attn_hb = attn_p.reshape(n_s, H, Bp, L, L)[:, :, :B]     # (n_s, H, B, L, L)
    attn = attn_hb.reshape(n_s, B, H, L, L)
    return out, attn


def _reference(h, wq, bq, wk, bk, wv, bv, wo, bo, gamma, beta, num_heads):
    # pure-JAX reference of the PyTorch forward (eval mode)
    n_s, B, L, D = h.shape
    H = num_heads
    d_k = wq.shape[-1] // H
    d_v = wv.shape[-1] // H
    q = jnp.einsum('sbld,sde->sble', h, wq) + bq[:, None, None, :]
    k = jnp.einsum('sbld,sde->sble', h, wk) + bk[:, None, None, :]
    v = jnp.einsum('sbld,sde->sble', h, wv) + bv[:, None, None, :]
    q = q.reshape(n_s, B, L, H, d_k)
    k = k.reshape(n_s, B, L, H, d_k)
    v = v.reshape(n_s, B, L, H, d_v)
    scores = jnp.einsum('sblhd,sbmhd->shblm', q, k) / (float(d_k) ** 0.5)
    attn_hb = jax.nn.softmax(scores, axis=-1)                     # (n_s, H, B, L, L)
    ctx = jnp.einsum('shblm,sbmhd->sblhd', attn_hb, v).reshape(n_s, B, L, H * d_v)
    m = jnp.einsum('sble,sed->sbld', ctx, wo) + bo[:, None, None, :]
    y = h + m
    mean = jnp.mean(y, axis=-1, keepdims=True)
    var = jnp.mean((y - mean) ** 2, axis=-1, keepdims=True)
    out = (y - mean) / jnp.sqrt(var + LN_EPS) * gamma + beta
    attn = attn_hb.reshape(n_s, B, H, L, L)   # torch's view(B, H, L, L) quirk
    return out, attn


if __name__ == "__main__":
    # Small shapes consistent with the module's forward
    n_s, batch, seq = 2, 2, 8
    d_mech, H_c, d_k, d_v = 32, 4, 8, 8

    key = jax.random.PRNGKey(0)
    ks = jax.random.split(key, 11)
    scale = 0.1

    h = jax.random.normal(ks[0], (n_s, batch, seq, d_mech), dtype=jnp.float32)
    # per-mechanism projection weights, stored as (d_in, d_out) = W.T of nn.Linear
    wq = scale * jax.random.normal(ks[1], (n_s, d_mech, H_c * d_k), jnp.float32)
    bq = scale * jax.random.normal(ks[2], (n_s, H_c * d_k), jnp.float32)
    wk = scale * jax.random.normal(ks[3], (n_s, d_mech, H_c * d_k), jnp.float32)
    bk = scale * jax.random.normal(ks[4], (n_s, H_c * d_k), jnp.float32)
    wv = scale * jax.random.normal(ks[5], (n_s, d_mech, H_c * d_v), jnp.float32)
    bv = scale * jax.random.normal(ks[6], (n_s, H_c * d_v), jnp.float32)
    wo = scale * jax.random.normal(ks[7], (n_s, H_c * d_v, d_mech), jnp.float32)
    bo = scale * jax.random.normal(ks[8], (n_s, d_mech), jnp.float32)
    gamma = 1.0 + 0.1 * jax.random.normal(ks[9], (d_mech,), jnp.float32)
    beta = 0.1 * jax.random.normal(ks[10], (d_mech,), jnp.float32)

    # Full path (output + attention probs)
    out, attn = inter_mechanism_attention_sublayer(
        h, wq, bq, wk, bk, wv, bv, wo, bo, gamma, beta, num_heads=H_c)
    out = jax.block_until_ready(out)
    attn = jax.block_until_ready(attn)

    # Fast path (attention-probs writeback skipped)
    out_fast, _ = inter_mechanism_attention_sublayer(
        h, wq, bq, wk, bk, wv, bv, wo, bo, gamma, beta, num_heads=H_c,
        return_attn=False)
    out_fast = jax.block_until_ready(out_fast)

    ref_out, ref_attn = _reference(h, wq, bq, wk, bk, wv, bv, wo, bo,
                                   gamma, beta, H_c)

    assert out.shape == (n_s, batch, seq, d_mech)
    assert attn.shape == (n_s, batch, H_c, seq, seq)
    # slightly relaxed tolerance: softmax uses the EUP approximate reciprocal
    assert jnp.allclose(out, ref_out, atol=2e-3, rtol=2e-3), "output mismatch vs reference"
    assert jnp.allclose(attn, ref_attn, atol=2e-3, rtol=2e-3), "attention mismatch vs reference"
    assert jnp.allclose(out_fast, ref_out, atol=2e-3, rtol=2e-3), "fast-path output mismatch"

    print("KERNEL_OK")
</pallas_src>

<mosaic_0001>
module attributes {stable_mosaic.version = 11 : i64} {
  func.func @_imha_kernel(%arg0: i32, %arg1: i32, %arg2: memref<1x2x8x32xf32, #tpu.memory_space<vmem>>, %arg3: memref<1x32x32xf32, #tpu.memory_space<vmem>>, %arg4: memref<1x1x32xf32, #tpu.memory_space<vmem>>, %arg5: memref<1x32x32xf32, #tpu.memory_space<vmem>>, %arg6: memref<1x1x32xf32, #tpu.memory_space<vmem>>, %arg7: memref<1x32x32xf32, #tpu.memory_space<vmem>>, %arg8: memref<1x1x32xf32, #tpu.memory_space<vmem>>, %arg9: memref<1x32x32xf32, #tpu.memory_space<vmem>>, %arg10: memref<1x1x32xf32, #tpu.memory_space<vmem>>, %arg11: memref<1x32xf32, #tpu.memory_space<vmem>>, %arg12: memref<1x32xf32, #tpu.memory_space<vmem>>, %arg13: memref<1x2x8x32xf32, #tpu.memory_space<vmem>>, %arg14: memref<4x2x8x8xf32, #tpu.memory_space<vmem>>, %arg15: memref<16x32xf32, #tpu.memory_space<vmem>>) attributes {dimension_semantics = [#tpu.dimension_semantics<parallel>, #tpu.dimension_semantics<arbitrary>], iteration_bounds = array<i64: 2, 1>, scalar_prefetch = 0 : i64, scratch_operands = 1 : i64, tpu.core_type = #tpu.core_type<tc>, window_params = [{transform_indices = @transform_0, window_bounds = array<i64: 1, 2, 8, 32>}, {transform_indices = @transform_1, window_bounds = array<i64: 1, 32, 32>}, {transform_indices = @transform_2, window_bounds = array<i64: 1, 1, 32>}, {transform_indices = @transform_3, window_bounds = array<i64: 1, 32, 32>}, {transform_indices = @transform_4, window_bounds = array<i64: 1, 1, 32>}, {transform_indices = @transform_5, window_bounds = array<i64: 1, 32, 32>}, {transform_indices = @transform_6, window_bounds = array<i64: 1, 1, 32>}, {transform_indices = @transform_7, window_bounds = array<i64: 1, 32, 32>}, {transform_indices = @transform_8, window_bounds = array<i64: 1, 1, 32>}, {pipeline_mode = #tpu.pipeline_mode<synchronous>, transform_indices = @transform_9, window_bounds = array<i64: 1, 32>}, {pipeline_mode = #tpu.pipeline_mode<synchronous>, transform_indices = @transform_10, window_bounds = array<i64: 1, 32>}, {transform_indices = @transform_11, window_bounds = array<i64: 1, 2, 8, 32>}, {transform_indices = @transform_12, window_bounds = array<i64: 4, 2, 8, 8>}]} {
    %c0 = arith.constant 0 : index
    %c0_0 = arith.constant 0 : index
    %c0_1 = arith.constant 0 : index
    %c0_2 = arith.constant 0 : index
    %0 = vector.load %arg2[%c0, %c0_0, %c0_1, %c0_2] : memref<1x2x8x32xf32, #tpu.memory_space<vmem>>, vector<1x2x8x32xf32>
    %1 = vector.shape_cast %0 : vector<1x2x8x32xf32> to vector<2x8x32xf32>
    %2 = vector.shape_cast %1 : vector<2x8x32xf32> to vector<16x32xf32>
    %c0_3 = arith.constant 0 : index
    %c0_4 = arith.constant 0 : index
    %c0_5 = arith.constant 0 : index
    %3 = vector.load %arg3[%c0_3, %c0_4, %c0_5] : memref<1x32x32xf32, #tpu.memory_space<vmem>>, vector<1x32x32xf32>
    %4 = vector.shape_cast %3 : vector<1x32x32xf32> to vector<32x32xf32>
    %cst = arith.constant dense<0.000000e+00> : vector<16x32xf32>
    %5 = tpu.matmul %2, %4, %cst {dimension_numbers = #tpu.dot_dimension_numbers<[1], [0], [0], [1], [0, 0, 1, 1], [], []>} : vector<16x32xf32>, vector<32x32xf32>, vector<16x32xf32> -> vector<16x32xf32>
    %c0_6 = arith.constant 0 : index
    %c0_7 = arith.constant 0 : index
    %c0_8 = arith.constant 0 : index
    %6 = vector.load %arg4[%c0_6, %c0_7, %c0_8] : memref<1x1x32xf32, #tpu.memory_space<vmem>>, vector<1x1x32xf32>
    %7 = vector.shape_cast %6 : vector<1x1x32xf32> to vector<1x32xf32>
    %8 = vector.broadcast %7 : vector<1x32xf32> to vector<16x32xf32>
    %9 = arith.addf %5, %8 : vector<16x32xf32>
    %cst_9 = arith.constant 0.353553385 : f32
    %10 = vector.broadcast %cst_9 : f32 to vector<16x32xf32>
    %11 = arith.mulf %9, %10 : vector<16x32xf32>
    %c0_10 = arith.constant 0 : index
    %c0_11 = arith.constant 0 : index
    %c0_12 = arith.constant 0 : index
    %12 = vector.load %arg5[%c0_10, %c0_11, %c0_12] : memref<1x32x32xf32, #tpu.memory_space<vmem>>, vector<1x32x32xf32>
    %13 = vector.shape_cast %12 : vector<1x32x32xf32> to vector<32x32xf32>
    %cst_13 = arith.constant dense<0.000000e+00> : vector<16x32xf32>
    %14 = tpu.matmul %2, %13, %cst_13 {dimension_numbers = #tpu.dot_dimension_numbers<[1], [0], [0], [1], [0, 0, 1, 1], [], []>} : vector<16x32xf32>, vector<32x32xf32>, vector<16x32xf32> -> vector<16x32xf32>
    %c0_14 = arith.constant 0 : index
    %c0_15 = arith.constant 0 : index
    %c0_16 = arith.constant 0 : index
    %15 = vector.load %arg6[%c0_14, %c0_15, %c0_16] : memref<1x1x32xf32, #tpu.memory_space<vmem>>, vector<1x1x32xf32>
    %16 = vector.shape_cast %15 : vector<1x1x32xf32> to vector<1x32xf32>
    %17 = vector.broadcast %16 : vector<1x32xf32> to vector<16x32xf32>
    %18 = arith.addf %14, %17 : vector<16x32xf32>
    %c0_17 = arith.constant 0 : index
    %c0_18 = arith.constant 0 : index
    %c0_19 = arith.constant 0 : index
    %19 = vector.load %arg7[%c0_17, %c0_18, %c0_19] : memref<1x32x32xf32, #tpu.memory_space<vmem>>, vector<1x32x32xf32>
    %20 = vector.shape_cast %19 : vector<1x32x32xf32> to vector<32x32xf32>
    %cst_20 = arith.constant dense<0.000000e+00> : vector<16x32xf32>
    %21 = tpu.matmul %2, %20, %cst_20 {dimension_numbers = #tpu.dot_dimension_numbers<[1], [0], [0], [1], [0, 0, 1, 1], [], []>} : vector<16x32xf32>, vector<32x32xf32>, vector<16x32xf32> -> vector<16x32xf32>
    %c0_21 = arith.constant 0 : index
    %c0_22 = arith.constant 0 : index
    %c0_23 = arith.constant 0 : index
    %22 = vector.load %arg8[%c0_21, %c0_22, %c0_23] : memref<1x1x32xf32, #tpu.memory_space<vmem>>, vector<1x1x32xf32>
    %23 = vector.shape_cast %22 : vector<1x1x32xf32> to vector<1x32xf32>
    %24 = vector.broadcast %23 : vector<1x32xf32> to vector<16x32xf32>
    %25 = arith.addf %21, %24 : vector<16x32xf32>
    %26 = vector.extract_strided_slice %11 {offsets = [0, 0], sizes = [16, 8], strides = [1, 1]} : vector<16x32xf32> to vector<16x8xf32>
    %27 = vector.shape_cast %26 : vector<16x8xf32> to vector<2x8x8xf32>
    %28 = vector.extract_strided_slice %18 {offsets = [0, 0], sizes = [16, 8], strides = [1, 1]} : vector<16x32xf32> to vector<16x8xf32>
    %29 = vector.shape_cast %28 : vector<16x8xf32> to vector<2x8x8xf32>
    %30 = vector.extract_strided_slice %25 {offsets = [0, 0], sizes = [16, 8], strides = [1, 1]} : vector<16x32xf32> to vector<16x8xf32>
    %31 = vector.shape_cast %30 : vector<16x8xf32> to vector<2x8x8xf32>
    "tpu.trace_start"() <{level = 10 : i32, message = "bld,bmd->blm"}> : () -> ()
    %cst_24 = arith.constant dense<0.000000e+00> : vector<2x8x8xf32>
    %32 = tpu.matmul %27, %29, %cst_24 {dimension_numbers = #tpu.dot_dimension_numbers<[2], [2], [1], [1], [0, 0, 0, 1, 1, 1], [0], [0]>} : vector<2x8x8xf32>, vector<2x8x8xf32>, vector<2x8x8xf32> -> vector<2x8x8xf32>
    "tpu.trace_stop"() : () -> ()
    %cst_25 = arith.constant dense<0xFF800000> : vector<2x8xf32>
    %33 = vector.multi_reduction <maximumf>, %32, %cst_25 [2] : vector<2x8x8xf32> to vector<2x8xf32>
    %34 = vector.shape_cast %33 : vector<2x8xf32> to vector<2x8x1xf32>
    %35 = vector.broadcast %34 : vector<2x8x1xf32> to vector<2x8x8xf32>
    %36 = arith.subf %32, %35 : vector<2x8x8xf32>
    %37 = math.exp %36 : vector<2x8x8xf32>
    %cst_26 = arith.constant dense<0.000000e+00> : vector<2x8xf32>
    %38 = vector.multi_reduction <add>, %37, %cst_26 [2] : vector<2x8x8xf32> to vector<2x8xf32>
    %39 = vector.shape_cast %38 : vector<2x8xf32> to vector<2x8x1xf32>
    %40 = tpu.reciprocal %39 {approx = true} : vector<2x8x1xf32> -> vector<2x8x1xf32>
    %41 = vector.broadcast %40 : vector<2x8x1xf32> to vector<2x8x8xf32>
    %42 = arith.mulf %37, %41 : vector<2x8x8xf32>
    %c0_27 = arith.constant 0 : index
    %c0_28 = arith.constant 0 : index
    %c0_29 = arith.constant 0 : index
    %c0_30 = arith.constant 0 : index
    %43 = vector.load %arg14[%c0_27, %c0_28, %c0_29, %c0_30] : memref<4x2x8x8xf32, #tpu.memory_space<vmem>>, vector<1x2x8x8xf32>
    %44 = vector.shape_cast %43 : vector<1x2x8x8xf32> to vector<2x8x8xf32>
    %45 = vector.shape_cast %42 : vector<2x8x8xf32> to vector<1x2x8x8xf32>
    tpu.vector_store %arg14[%c0_27, %c0_28, %c0_29, %c0_30], %45 {strides = array<i32>} : memref<4x2x8x8xf32, #tpu.memory_space<vmem>>, vector<1x2x8x8xf32>,
    "tpu.trace_start"() <{level = 10 : i32, message = "blm,bmd->bld"}> : () -> ()
    %cst_31 = arith.constant dense<0.000000e+00> : vector<2x8x8xf32>
    %46 = tpu.matmul %42, %31, %cst_31 {dimension_numbers = #tpu.dot_dimension_numbers<[2], [1], [1], [2], [0, 0, 0, 1, 1, 2], [0], [0]>} : vector<2x8x8xf32>, vector<2x8x8xf32>, vector<2x8x8xf32> -> vector<2x8x8xf32>
    "tpu.trace_stop"() : () -> ()
    %47 = vector.shape_cast %46 : vector<2x8x8xf32> to vector<16x8xf32>
    %c0_32 = arith.constant 0 : index
    %c0_33 = arith.constant 0 : index
    %48 = vector.load %arg15[%c0_32, %c0_33] : memref<16x32xf32, #tpu.memory_space<vmem>>, vector<16x8xf32>
    tpu.vector_store %arg15[%c0_32, %c0_33], %47 {strides = array<i32>} : memref<16x32xf32, #tpu.memory_space<vmem>>, vector<16x8xf32>,
    %49 = vector.extract_strided_slice %11 {offsets = [0, 8], sizes = [16, 8], strides = [1, 1]} : vector<16x32xf32> to vector<16x8xf32>
    %50 = vector.shape_cast %49 : vector<16x8xf32> to vector<2x8x8xf32>
    %51 = vector.extract_strided_slice %18 {offsets = [0, 8], sizes = [16, 8], strides = [1, 1]} : vector<16x32xf32> to vector<16x8xf32>
    %52 = vector.shape_cast %51 : vector<16x8xf32> to vector<2x8x8xf32>
    %53 = vector.extract_strided_slice %25 {offsets = [0, 8], sizes = [16, 8], strides = [1, 1]} : vector<16x32xf32> to vector<16x8xf32>
    %54 = vector.shape_cast %53 : vector<16x8xf32> to vector<2x8x8xf32>
    "tpu.trace_start"() <{level = 10 : i32, message = "bld,bmd->blm"}> : () -> ()
    %cst_34 = arith.constant dense<0.000000e+00> : vector<2x8x8xf32>
    %55 = tpu.matmul %50, %52, %cst_34 {dimension_numbers = #tpu.dot_dimension_numbers<[2], [2], [1], [1], [0, 0, 0, 1, 1, 1], [0], [0]>} : vector<2x8x8xf32>, vector<2x8x8xf32>, vector<2x8x8xf32> -> vector<2x8x8xf32>
    "tpu.trace_stop"() : () -> ()
    %cst_35 = arith.constant dense<0xFF800000> : vector<2x8xf32>
    %56 = vector.multi_reduction <maximumf>, %55, %cst_35 [2] : vector<2x8x8xf32> to vector<2x8xf32>
    %57 = vector.shape_cast %56 : vector<2x8xf32> to vector<2x8x1xf32>
    %58 = vector.broadcast %57 : vector<2x8x1xf32> to vector<2x8x8xf32>
    %59 = arith.subf %55, %58 : vector<2x8x8xf32>
    %60 = math.exp %59 : vector<2x8x8xf32>
    %cst_36 = arith.constant dense<0.000000e+00> : vector<2x8xf32>
    %61 = vector.multi_reduction <add>, %60, %cst_36 [2] : vector<2x8x8xf32> to vector<2x8xf32>
    %62 = vector.shape_cast %61 : vector<2x8xf32> to vector<2x8x1xf32>
    %63 = tpu.reciprocal %62 {approx = true} : vector<2x8x1xf32> -> vector<2x8x1xf32>
    %64 = vector.broadcast %63 : vector<2x8x1xf32> to vector<2x8x8xf32>
    %65 = arith.mulf %60, %64 : vector<2x8x8xf32>
    %c1 = arith.constant 1 : index
    %c0_37 = arith.constant 0 : index
    %c0_38 = arith.constant 0 : index
    %c0_39 = arith.constant 0 : index
    %66 = vector.load %arg14[%c1, %c0_37, %c0_38, %c0_39] : memref<4x2x8x8xf32, #tpu.memory_space<vmem>>, vector<1x2x8x8xf32>
    %67 = vector.shape_cast %66 : vector<1x2x8x8xf32> to vector<2x8x8xf32>
    %68 = vector.shape_cast %65 : vector<2x8x8xf32> to vector<1x2x8x8xf32>
    tpu.vector_store %arg14[%c1, %c0_37, %c0_38, %c0_39], %68 {strides = array<i32>} : memref<4x2x8x8xf32, #tpu.memory_space<vmem>>, vector<1x2x8x8xf32>,
    "tpu.trace_start"() <{level = 10 : i32, message = "blm,bmd->bld"}> : () -> ()
    %cst_40 = arith.constant dense<0.000000e+00> : vector<2x8x8xf32>
    %69 = tpu.matmul %65, %54, %cst_40 {dimension_numbers = #tpu.dot_dimension_numbers<[2], [1], [1], [2], [0, 0, 0, 1, 1, 2], [0], [0]>} : vector<2x8x8xf32>, vector<2x8x8xf32>, vector<2x8x8xf32> -> vector<2x8x8xf32>
    "tpu.trace_stop"() : () -> ()
    %70 = vector.shape_cast %69 : vector<2x8x8xf32> to vector<16x8xf32>
    %c0_41 = arith.constant 0 : index
    %c8 = arith.constant 8 : index
    %71 = vector.load %arg15[%c0_41, %c8] : memref<16x32xf32, #tpu.memory_space<vmem>>, vector<16x8xf32>
    tpu.vector_store %arg15[%c0_41, %c8], %70 {strides = array<i32>} : memref<16x32xf32, #tpu.memory_space<vmem>>, vector<16x8xf32>,
    %72 = vector.extract_strided_slice %11 {offsets = [0, 16], sizes = [16, 8], strides = [1, 1]} : vector<16x32xf32> to vector<16x8xf32>
    %73 = vector.shape_cast %72 : vector<16x8xf32> to vector<2x8x8xf32>
    %74 = vector.extract_strided_slice %18 {offsets = [0, 16], sizes = [16, 8], strides = [1, 1]} : vector<16x32xf32> to vector<16x8xf32>
    %75 = vector.shape_cast %74 : vector<16x8xf32> to vector<2x8x8xf32>
    %76 = vector.extract_strided_slice %25 {offsets = [0, 16], sizes = [16, 8], strides = [1, 1]} : vector<16x32xf32> to vector<16x8xf32>
    %77 = vector.shape_cast %76 : vector<16x8xf32> to vector<2x8x8xf32>
    "tpu.trace_start"() <{level = 10 : i32, message = "bld,bmd->blm"}> : () -> ()
    %cst_42 = arith.constant dense<0.000000e+00> : vector<2x8x8xf32>
    %78 = tpu.matmul %73, %75, %cst_42 {dimension_numbers = #tpu.dot_dimension_numbers<[2], [2], [1], [1], [0, 0, 0, 1, 1, 1], [0], [0]>} : vector<2x8x8xf32>, vector<2x8x8xf32>, vector<2x8x8xf32> -> vector<2x8x8xf32>
    "tpu.trace_stop"() : () -> ()
    %cst_43 = arith.constant dense<0xFF800000> : vector<2x8xf32>
    %79 = vector.multi_reduction <maximumf>, %78, %cst_43 [2] : vector<2x8x8xf32> to vector<2x8xf32>
    %80 = vector.shape_cast %79 : vector<2x8xf32> to vector<2x8x1xf32>
    %81 = vector.broadcast %80 : vector<2x8x1xf32> to vector<2x8x8xf32>
    %82 = arith.subf %78, %81 : vector<2x8x8xf32>
    %83 = math.exp %82 : vector<2x8x8xf32>
    %cst_44 = arith.constant dense<0.000000e+00> : vector<2x8xf32>
    %84 = vector.multi_reduction <add>, %83, %cst_44 [2] : vector<2x8x8xf32> to vector<2x8xf32>
    %85 = vector.shape_cast %84 : vector<2x8xf32> to vector<2x8x1xf32>
    %86 = tpu.reciprocal %85 {approx = true} : vector<2x8x1xf32> -> vector<2x8x1xf32>
    %87 = vector.broadcast %86 : vector<2x8x1xf32> to vector<2x8x8xf32>
    %88 = arith.mulf %83, %87 : vector<2x8x8xf32>
    %c2 = arith.constant 2 : index
    %c0_45 = arith.constant 0 : index
    %c0_46 = arith.constant 0 : index
    %c0_47 = arith.constant 0 : index
    %89 = vector.load %arg14[%c2, %c0_45, %c0_46, %c0_47] : memref<4x2x8x8xf32, #tpu.memory_space<vmem>>, vector<1x2x8x8xf32>
    %90 = vector.shape_cast %89 : vector<1x2x8x8xf32> to vector<2x8x8xf32>
    %91 = vector.shape_cast %88 : vector<2x8x8xf32> to vector<1x2x8x8xf32>
    tpu.vector_store %arg14[%c2, %c0_45, %c0_46, %c0_47], %91 {strides = array<i32>} : memref<4x2x8x8xf32, #tpu.memory_space<vmem>>, vector<1x2x8x8xf32>,
    "tpu.trace_start"() <{level = 10 : i32, message = "blm,bmd->bld"}> : () -> ()
    %cst_48 = arith.constant dense<0.000000e+00> : vector<2x8x8xf32>
    %92 = tpu.matmul %88, %77, %cst_48 {dimension_numbers = #tpu.dot_dimension_numbers<[2], [1], [1], [2], [0, 0, 0, 1, 1, 2], [0], [0]>} : vector<2x8x8xf32>, vector<2x8x8xf32>, vector<2x8x8xf32> -> vector<2x8x8xf32>
    "tpu.trace_stop"() : () -> ()
    %93 = vector.shape_cast %92 : vector<2x8x8xf32> to vector<16x8xf32>
    %c0_49 = arith.constant 0 : index
    %c16 = arith.constant 16 : index
    %94 = vector.load %arg15[%c0_49, %c16] : memref<16x32xf32, #tpu.memory_space<vmem>>, vector<16x8xf32>
    tpu.vector_store %arg15[%c0_49, %c16], %93 {strides = array<i32>} : memref<16x32xf32, #tpu.memory_space<vmem>>, vector<16x8xf32>,
    %95 = vector.extract_strided_slice %11 {offsets = [0, 24], sizes = [16, 8], strides = [1, 1]} : vector<16x32xf32> to vector<16x8xf32>
    %96 = vector.shape_cast %95 : vector<16x8xf32> to vector<2x8x8xf32>
    %97 = vector.extract_strided_slice %18 {offsets = [0, 24], sizes = [16, 8], strides = [1, 1]} : vector<16x32xf32> to vector<16x8xf32>
    %98 = vector.shape_cast %97 : vector<16x8xf32> to vector<2x8x8xf32>
    %99 = vector.extract_strided_slice %25 {offsets = [0, 24], sizes = [16, 8], strides = [1, 1]} : vector<16x32xf32> to vector<16x8xf32>
    %100 = vector.shape_cast %99 : vector<16x8xf32> to vector<2x8x8xf32>
    "tpu.trace_start"() <{level = 10 : i32, message = "bld,bmd->blm"}> : () -> ()
    %cst_50 = arith.constant dense<0.000000e+00> : vector<2x8x8xf32>
    %101 = tpu.matmul %96, %98, %cst_50 {dimension_numbers = #tpu.dot_dimension_numbers<[2], [2], [1], [1], [0, 0, 0, 1, 1, 1], [0], [0]>} : vector<2x8x8xf32>, vector<2x8x8xf32>, vector<2x8x8xf32> -> vector<2x8x8xf32>
    "tpu.trace_stop"() : () -> ()
    %cst_51 = arith.constant dense<0xFF800000> : vector<2x8xf32>
    %102 = vector.multi_reduction <maximumf>, %101, %cst_51 [2] : vector<2x8x8xf32> to vector<2x8xf32>
    %103 = vector.shape_cast %102 : vector<2x8xf32> to vector<2x8x1xf32>
    %104 = vector.broadcast %103 : vector<2x8x1xf32> to vector<2x8x8xf32>
    %105 = arith.subf %101, %104 : vector<2x8x8xf32>
    %106 = math.exp %105 : vector<2x8x8xf32>
    %cst_52 = arith.constant dense<0.000000e+00> : vector<2x8xf32>
    %107 = vector.multi_reduction <add>, %106, %cst_52 [2] : vector<2x8x8xf32> to vector<2x8xf32>
    %108 = vector.shape_cast %107 : vector<2x8xf32> to vector<2x8x1xf32>
    %109 = tpu.reciprocal %108 {approx = true} : vector<2x8x1xf32> -> vector<2x8x1xf32>
    %110 = vector.broadcast %109 : vector<2x8x1xf32> to vector<2x8x8xf32>
    %111 = arith.mulf %106, %110 : vector<2x8x8xf32>
    %c3 = arith.constant 3 : index
    %c0_53 = arith.constant 0 : index
    %c0_54 = arith.constant 0 : index
    %c0_55 = arith.constant 0 : index
    %112 = vector.load %arg14[%c3, %c0_53, %c0_54, %c0_55] : memref<4x2x8x8xf32, #tpu.memory_space<vmem>>, vector<1x2x8x8xf32>
    %113 = vector.shape_cast %112 : vector<1x2x8x8xf32> to vector<2x8x8xf32>
    %114 = vector.shape_cast %111 : vector<2x8x8xf32> to vector<1x2x8x8xf32>
    tpu.vector_store %arg14[%c3, %c0_53, %c0_54, %c0_55], %114 {strides = array<i32>} : memref<4x2x8x8xf32, #tpu.memory_space<vmem>>, vector<1x2x8x8xf32>,
    "tpu.trace_start"() <{level = 10 : i32, message = "blm,bmd->bld"}> : () -> ()
    %cst_56 = arith.constant dense<0.000000e+00> : vector<2x8x8xf32>
    %115 = tpu.matmul %111, %100, %cst_56 {dimension_numbers = #tpu.dot_dimension_numbers<[2], [1], [1], [2], [0, 0, 0, 1, 1, 2], [0], [0]>} : vector<2x8x8xf32>, vector<2x8x8xf32>, vector<2x8x8xf32> -> vector<2x8x8xf32>
    "tpu.trace_stop"() : () -> ()
    %116 = vector.shape_cast %115 : vector<2x8x8xf32> to vector<16x8xf32>
    %c0_57 = arith.constant 0 : index
    %c24 = arith.constant 24 : index
    %117 = vector.load %arg15[%c0_57, %c24] : memref<16x32xf32, #tpu.memory_space<vmem>>, vector<16x8xf32>
    tpu.vector_store %arg15[%c0_57, %c24], %116 {strides = array<i32>} : memref<16x32xf32, #tpu.memory_space<vmem>>, vector<16x8xf32>,
    %c0_58 = arith.constant 0 : index
    %c0_59 = arith.constant 0 : index
    %118 = vector.load %arg15[%c0_58, %c0_59] : memref<16x32xf32, #tpu.memory_space<vmem>>, vector<16x32xf32>
    %c0_60 = arith.constant 0 : index
    %c0_61 = arith.constant 0 : index
    %c0_62 = arith.constant 0 : index
    %119 = vector.load %arg9[%c0_60, %c0_61, %c0_62] : memref<1x32x32xf32, #tpu.memory_space<vmem>>, vector<1x32x32xf32>
    %120 = vector.shape_cast %119 : vector<1x32x32xf32> to vector<32x32xf32>
    %cst_63 = arith.constant dense<0.000000e+00> : vector<16x32xf32>
    %121 = tpu.matmul %118, %120, %cst_63 {dimension_numbers = #tpu.dot_dimension_numbers<[1], [0], [0], [1], [0, 0, 1, 1], [], []>} : vector<16x32xf32>, vector<32x32xf32>, vector<16x32xf32> -> vector<16x32xf32>
    %c0_64 = arith.constant 0 : index
    %c0_65 = arith.constant 0 : index
    %c0_66 = arith.constant 0 : index
    %122 = vector.load %arg10[%c0_64, %c0_65, %c0_66] : memref<1x1x32xf32, #tpu.memory_space<vmem>>, vector<1x1x32xf32>
    %123 = vector.shape_cast %122 : vector<1x1x32xf32> to vector<1x32xf32>
    %124 = vector.broadcast %123 : vector<1x32xf32> to vector<16x32xf32>
    %125 = arith.addf %121, %124 : vector<16x32xf32>
    %126 = arith.addf %125, %2 : vector<16x32xf32>
    %cst_67 = arith.constant dense<0.000000e+00> : vector<16xf32>
    %127 = vector.multi_reduction <add>, %126, %cst_67 [1] : vector<16x32xf32> to vector<16xf32>
    %128 = vector.shape_cast %127 : vector<16xf32> to vector<16x1xf32>
    %cst_68 = arith.constant 3.200000e+01 : f32
    %129 = vector.broadcast %cst_68 : f32 to vector<16x1xf32>
    %130 = arith.divf %128, %129 : vector<16x1xf32>
    %131 = vector.broadcast %130 : vector<16x1xf32> to vector<16x32xf32>
    %132 = arith.subf %126, %131 : vector<16x32xf32>
    %133 = arith.mulf %132, %132 : vector<16x32xf32>
    %cst_69 = arith.constant dense<0.000000e+00> : vector<16xf32>
    %134 = vector.multi_reduction <add>, %133, %cst_69 [1] : vector<16x32xf32> to vector<16xf32>
    %135 = vector.shape_cast %134 : vector<16xf32> to vector<16x1xf32>
    %cst_70 = arith.constant 3.200000e+01 : f32
    %136 = vector.broadcast %cst_70 : f32 to vector<16x1xf32>
    %137 = arith.divf %135, %136 : vector<16x1xf32>
    %cst_71 = arith.constant 9.99999974E-6 : f32
    %138 = vector.broadcast %cst_71 : f32 to vector<16x1xf32>
    %139 = arith.addf %137, %138 : vector<16x1xf32>
    %140 = math.rsqrt %139 : vector<16x1xf32>
    %141 = vector.broadcast %140 : vector<16x1xf32> to vector<16x32xf32>
    %142 = arith.mulf %132, %141 : vector<16x32xf32>
    %c0_72 = arith.constant 0 : index
    %c0_73 = arith.constant 0 : index
    %143 = vector.load %arg11[%c0_72, %c0_73] : memref<1x32xf32, #tpu.memory_space<vmem>>, vector<1x32xf32>
    %144 = vector.broadcast %143 : vector<1x32xf32> to vector<16x32xf32>
    %145 = arith.mulf %142, %144 : vector<16x32xf32>
    %c0_74 = arith.constant 0 : index
    %c0_75 = arith.constant 0 : index
    %146 = vector.load %arg12[%c0_74, %c0_75] : memref<1x32xf32, #tpu.memory_space<vmem>>, vector<1x32xf32>
    %147 = vector.broadcast %146 : vector<1x32xf32> to vector<16x32xf32>
    %148 = arith.addf %145, %147 : vector<16x32xf32>
    %149 = vector.shape_cast %148 : vector<16x32xf32> to vector<2x8x32xf32>
    %c0_76 = arith.constant 0 : index
    %c0_77 = arith.constant 0 : index
    %c0_78 = arith.constant 0 : index
    %c0_79 = arith.constant 0 : index
    %150 = vector.load %arg13[%c0_76, %c0_77, %c0_78, %c0_79] : memref<1x2x8x32xf32, #tpu.memory_space<vmem>>, vector<1x2x8x32xf32>
    %151 = vector.shape_cast %150 : vector<1x2x8x32xf32> to vector<2x8x32xf32>
    %152 = vector.shape_cast %149 : vector<2x8x32xf32> to vector<1x2x8x32xf32>
    tpu.vector_store %arg13[%c0_76, %c0_77, %c0_78, %c0_79], %152 {strides = array<i32>} : memref<1x2x8x32xf32, #tpu.memory_space<vmem>>, vector<1x2x8x32xf32>,
    return
  }
  func.func @transform_0(%arg0: i32, %arg1: i32) -> (i32, i32, i32, i32) {
    %c0_i32 = arith.constant 0 : i32
    %c0_i32_0 = arith.constant 0 : i32
    %c0_i32_1 = arith.constant 0 : i32
    return %arg0, %arg1, %c0_i32, %c0_i32_0 : i32, i32, i32, i32
  }
  func.func @transform_1(%arg0: i32, %arg1: i32) -> (i32, i32, i32) {
    %c0_i32 = arith.constant 0 : i32
    %c0_i32_0 = arith.constant 0 : i32
    %c0_i32_1 = arith.constant 0 : i32
    return %arg0, %c0_i32, %c0_i32_0 : i32, i32, i32
  }
  func.func @transform_2(%arg0: i32, %arg1: i32) -> (i32, i32, i32) {
    %c0_i32 = arith.constant 0 : i32
    %c0_i32_0 = arith.constant 0 : i32
    %c0_i32_1 = arith.constant 0 : i32
    return %arg0, %c0_i32, %c0_i32_0 : i32, i32, i32
  }
  func.func @transform_3(%arg0: i32, %arg1: i32) -> (i32, i32, i32) {
    %c0_i32 = arith.constant 0 : i32
    %c0_i32_0 = arith.constant 0 : i32
    %c0_i32_1 = arith.constant 0 : i32
    return %arg0, %c0_i32, %c0_i32_0 : i32, i32, i32
  }
  func.func @transform_4(%arg0: i32, %arg1: i32) -> (i32, i32, i32) {
    %c0_i32 = arith.constant 0 : i32
    %c0_i32_0 = arith.constant 0 : i32
    %c0_i32_1 = arith.constant 0 : i32
    return %arg0, %c0_i32, %c0_i32_0 : i32, i32, i32
  }
  func.func @transform_5(%arg0: i32, %arg1: i32) -> (i32, i32, i32) {
    %c0_i32 = arith.constant 0 : i32
    %c0_i32_0 = arith.constant 0 : i32
    %c0_i32_1 = arith.constant 0 : i32
    return %arg0, %c0_i32, %c0_i32_0 : i32, i32, i32
  }
  func.func @transform_6(%arg0: i32, %arg1: i32) -> (i32, i32, i32) {
    %c0_i32 = arith.constant 0 : i32
    %c0_i32_0 = arith.constant 0 : i32
    %c0_i32_1 = arith.constant 0 : i32
    return %arg0, %c0_i32, %c0_i32_0 : i32, i32, i32
  }
  func.func @transform_7(%arg0: i32, %arg1: i32) -> (i32, i32, i32) {
    %c0_i32 = arith.constant 0 : i32
    %c0_i32_0 = arith.constant 0 : i32
    %c0_i32_1 = arith.constant 0 : i32
    return %arg0, %c0_i32, %c0_i32_0 : i32, i32, i32
  }
  func.func @transform_8(%arg0: i32, %arg1: i32) -> (i32, i32, i32) {
    %c0_i32 = arith.constant 0 : i32
    %c0_i32_0 = arith.constant 0 : i32
    %c0_i32_1 = arith.constant 0 : i32
    return %arg0, %c0_i32, %c0_i32_0 : i32, i32, i32
  }
  func.func @transform_9(%arg0: i32, %arg1: i32) -> (i32, i32) {
    %c0_i32 = arith.constant 0 : i32
    %c0_i32_0 = arith.constant 0 : i32
    %c0_i32_1 = arith.constant 0 : i32
    return %c0_i32, %c0_i32_0 : i32, i32
  }
  func.func @transform_10(%arg0: i32, %arg1: i32) -> (i32, i32) {
    %c0_i32 = arith.constant 0 : i32
    %c0_i32_0 = arith.constant 0 : i32
    %c0_i32_1 = arith.constant 0 : i32
    return %c0_i32, %c0_i32_0 : i32, i32
  }
  func.func @transform_11(%arg0: i32, %arg1: i32) -> (i32, i32, i32, i32) {
    %c0_i32 = arith.constant 0 : i32
    %c0_i32_0 = arith.constant 0 : i32
    %c0_i32_1 = arith.constant 0 : i32
    return %arg0, %arg1, %c0_i32, %c0_i32_0 : i32, i32, i32, i32
  }
  func.func @transform_12(%arg0: i32, %arg1: i32) -> (i32, i32, i32, i32) {
    %c0_i32 = arith.constant 0 : i32
    %c0_i32_0 = arith.constant 0 : i32
    %c0_i32_1 = arith.constant 0 : i32
    return %arg0, %arg1, %c0_i32, %c0_i32_0 : i32, i32, i32, i32
  }
}

</mosaic_0001>

<llo_original>
// kernel: _run_pallas.1
$region0: #{_run_pallas.1}
  #allocation0 [shape = 'u32[]', space=smem, size = 0x4, offset = 0x4, fixed_abs, tag = 'smem constant byte address 0x4 - core index']
  #allocation1 [shape = 'u32[144,128]{1,0:T(1,128)}', space=vmem, size = 0x12000, scoped, tag = 'internal scratch']
  #allocation2 [shape = 'f32[16,32]{1,0:T(8,128)}', space=vmem, size = 0x2000, scoped, tag = 'scratch operand']
  %s0 = inlined_call_operand.hbm [shape: f32[2,2,8,32], index: 0, kind: input, shape index: {}]
  %s1 = inlined_call_operand.hbm [shape: f32[2,32,32], index: 1, kind: input, shape index: {}]
  %s2 = inlined_call_operand.vmem [shape: f32[2,1,32], index: 2, kind: input, shape index: {}]
  %s3 = inlined_call_operand.hbm [shape: f32[2,32,32], index: 3, kind: input, shape index: {}]
  %s4 = inlined_call_operand.vmem [shape: f32[2,1,32], index: 4, kind: input, shape index: {}]
  %s5 = inlined_call_operand.hbm [shape: f32[2,32,32], index: 5, kind: input, shape index: {}]
  %s6 = inlined_call_operand.vmem [shape: f32[2,1,32], index: 6, kind: input, shape index: {}]
  %s7 = inlined_call_operand.hbm [shape: f32[2,32,32], index: 7, kind: input, shape index: {}]
  %s8 = inlined_call_operand.vmem [shape: f32[2,1,32], index: 8, kind: input, shape index: {}]
  %s9 = inlined_call_operand.vmem [shape: f32[1,32], index: 9, kind: input, shape index: {}]
  %s10 = inlined_call_operand.vmem [shape: f32[1,32], index: 10, kind: input, shape index: {}]
  %s11 = inlined_call_operand.hbm [shape: f32[2,2,8,32], index: 11, kind: output, shape index: {0}]
  %s12 = inlined_call_operand.hbm [shape: f32[8,2,8,8], index: 12, kind: output, shape index: {1}]
  %13 = xla_tuple %s11, %s12
  %s14 = sld [smem:[#allocation0]]
  $region105: #{_run_pallas.1} parent=0
    _
  %s16 = ssub.s32 1, %s14
  %s17 = scalar_select 0, %s16, %s14
  $region1: #{_run_pallas.1} parent=0
    #allocation3 [shape = 'u8[16384]{0}', space=vmem, size = 0x4000, scoped, tag = 'input window, operand 0']
    #allocation4 [shape = 's32[2]{0}', space=sflag, size = 0x8, scoped, tag = 'scoped memory for _run_pallas.1']
    #allocation5 [shape = 's32[2]{0}', space=sflag, size = 0x8, scoped, tag = 'scoped memory for _run_pallas.1']
    #allocation6 [shape = 'u8[32768]{0}', space=vmem, size = 0x8000, scoped, tag = 'input window, operand 1']
    #allocation7 [shape = 's32[2]{0}', space=sflag, size = 0x8, scoped, tag = 'scoped memory for _run_pallas.1']
    #allocation8 [shape = 'u8[32768]{0}', space=vmem, size = 0x8000, scoped, tag = 'input window, operand 3']
    #allocation9 [shape = 'u8[32768]{0}', space=vmem, size = 0x8000, scoped, tag = 'input window, operand 5']
    #allocation10 [shape = 's32[2]{0}', space=sflag, size = 0x8, scoped, tag = 'scoped memory for _run_pallas.1']
    #allocation11 [shape = 'u8[32768]{0}', space=vmem, size = 0x8000, scoped, tag = 'input window, operand 7']
    #allocation12 [shape = 'u8[16384]{0}', space=vmem, size = 0x4000, scoped, tag = 'output window, operand 0']
    #allocation13 [shape = 'u8[65536]{0}', space=vmem, size = 0x10000, scoped, tag = 'output window, operand 1']
    #allocation14 [shape = 's32[2]{0}', space=sflag, size = 0x8, scoped, tag = 'scoped memory for _run_pallas.1']
    %18 = vsyncpa [#allocation4], 0
    %s19 = scalar_lea.sflag [#allocation4], 1
    %20 = vsyncpa %s19, 0
    %21 = vsyncpa [#allocation7], 0
    %s22 = scalar_lea.sflag [#allocation7], 1
    %23 = vsyncpa %s22, 0
    %24 = vsyncpa [#allocation10], 0
    %s25 = scalar_lea.sflag [#allocation10], 1
    %26 = vsyncpa %s25, 0
    %27 = vsyncpa [#allocation5], 0
    %s28 = scalar_lea.sflag [#allocation5], 1
    %29 = vsyncpa %s28, 0
    %30 = vsyncpa [#allocation14], 0
    %s31 = scalar_lea.sflag [#allocation14], 1
    %32 = vsyncpa %s31, 0
    loop: start=0, step=1, limit=4
    $region2: #{_run_pallas.1} parent=1 // loop_pre_header
      _
    $region3: #{_run_pallas.1} parent=1 // loop_header
      %s34 = sphi 0, %s38
      %p35 = scmp.ge.s32.totalorder %s34, 4
      %s41 = sphi 0, %s53
      %s42 = sphi 0, %s49
      %s43 = sphi 0, %s41
      %s44 = sphi 0, %s42
      %s45 = sphi 0, %s43
      %s46 = sphi 0, %s44
      %s58 = sphi 0, %s60
      %s61 = sphi 0, %s58
      %s62 = sphi 0, %s61
      %s78 = sphi 0, %s62
      %s84 = sphi 0, %s86
      %s87 = sphi 0, %s84
      %s88 = sphi 0, %s87
      %s104 = sphi 0, %s88
      %s110 = sphi 0, %s112
      %s113 = sphi 0, %s110
      %s114 = sphi 0, %s113
      %s130 = sphi 0, %s114
      %s136 = sphi 0, %s138
      %s139 = sphi 0, %s136
      %s140 = sphi 0, %s139
      %s156 = sphi 0, %s140
      %s162 = sphi 0, %s164
      %s165 = sphi 0, %s162
      %s166 = sphi 0, %s165
      %s182 = sphi 0, %s166
      %s188 = sphi 0, %s190
      %s191 = sphi 0, %s188
      %s192 = sphi 0, %s191
      %s208 = sphi 0, %s192
      %s214 = sphi 0, %s216
      %s217 = sphi 0, %s214
      %s218 = sphi 0, %s217
      %s234 = sphi 0, %s218
      %s240 = sphi 0, %s242
      %s243 = sphi 0, %s240
      %s244 = sphi 0, %s243
      %s260 = sphi 0, %s244
      %s266 = sphi 0, %s268
      %s269 = sphi 0, %s266
      %s270 = sphi 0, %s269
      %s286 = sphi 0, %s270
      %s290 = sphi 0, %s290
      %s292 = sphi 0, %s290
      %s293 = sphi 0, %s292
      %s307 = sphi 0, %s293
      %s311 = sphi 0, %s311
      %s313 = sphi 0, %s311
      %s314 = sphi 0, %s313
      %s328 = sphi 0, %s314
      %s336 = sphi 0, %s338
      %s339 = sphi 0, %s336
      %s340 = sphi 0, %s339
      %s356 = sphi 0, %s340
      %s364 = sphi 0, %s366
      %s367 = sphi 0, %s364
      %s368 = sphi 0, %s367
      %s384 = sphi 0, %s368
    $region4: #{_run_pallas.1} parent=1 // loop_header_branch
      %37 = sbr.rel (%p35) target = $region8
    $region5: #{_run_pallas.1} parent=1 // loop_body
      %s39 = ssub.s32 %s34, 1
      %s40 = ssub.s32 %s34, 2
      %s47 = sadd.s32 1, %s42
      %p48 = scmp.ge.s32.totalorder %s47, 1
      %s49 = scalar_select %p48, 0, %s47
      %s50 = sadd.s32 1, %s41
      %s51 = scalar_select %p48, %s50, %s41
      %p52 = scmp.ge.s32.totalorder %s51, 2
      %s53 = scalar_select %p52, 0, %s51
      %s54 = ssub.s32 %s41, %s53
      %s55 = ssub.s32 %s42, %s49
      %s56 = sor.u32 %s54, %s55
      %p57 = scmp.eq.s32.totalorder %s56, 0
      %s59 = sadd.s32 %s58, 1
      %s60 = scalar_select %p57, %s58, %s59
      %p63 = pneg %p57
      %p64 = scmp.eq.s32.totalorder %s34, 1
      %p65 = por %p63, %p64
      %p66 = scmp.ne.s32.totalorder %s58, %s61
      %p67 = scmp.eq.s32.totalorder %s34, 0
      %p68 = por %p66, %p67
      %p69 = scmp.ne.s32.totalorder %s58, %s61
      %p70 = scmp.eq.s32.totalorder %s39, 1
      %p71 = por %p69, %p70
      %p72 = scmp.ne.s32.totalorder %s61, %s62
      %p73 = scmp.eq.s32.totalorder %s39, 0
      %p74 = por %p72, %p73
      %p75 = scmp.ne.s32.totalorder %s61, %s62
      %p76 = scmp.eq.s32.totalorder %s40, 1
      %p77 = por %p75, %p76
      %p79 = scmp.ne.s32.totalorder %s62, %s78
      %p80 = scmp.eq.s32.totalorder %s40, 0
      %p81 = por %p79, %p80
      %s82 = ssub.s32 %s41, %s53
      %p83 = scmp.eq.s32.totalorder %s82, 0
      %s85 = sadd.s32 %s84, 1
      %s86 = scalar_select %p83, %s84, %s85
      %p89 = pneg %p83
      %p90 = scmp.eq.s32.totalorder %s34, 1
      %p91 = por %p89, %p90
      %p92 = scmp.ne.s32.totalorder %s84, %s87
      %p93 = scmp.eq.s32.totalorder %s34, 0
      %p94 = por %p92, %p93
      %p95 = scmp.ne.s32.totalorder %s84, %s87
      %p96 = scmp.eq.s32.totalorder %s39, 1
      %p97 = por %p95, %p96
      %p98 = scmp.ne.s32.totalorder %s87, %s88
      %p99 = scmp.eq.s32.totalorder %s39, 0
      %p100 = por %p98, %p99
      %p101 = scmp.ne.s32.totalorder %s87, %s88
      %p102 = scmp.eq.s32.totalorder %s40, 1
      %p103 = por %p101, %p102
      %p105 = scmp.ne.s32.totalorder %s88, %s104
      %p106 = scmp.eq.s32.totalorder %s40, 0
      %p107 = por %p105, %p106
      %s108 = ssub.s32 %s41, %s53
      %p109 = scmp.eq.s32.totalorder %s108, 0
      %s111 = sadd.s32 %s110, 1
      %s112 = scalar_select %p109, %s110, %s111
      %p115 = pneg %p109
      %p116 = scmp.eq.s32.totalorder %s34, 1
      %p117 = por %p115, %p116
      %p118 = scmp.ne.s32.totalorder %s110, %s113
      %p119 = scmp.eq.s32.totalorder %s34, 0
      %p120 = por %p118, %p119
      %p121 = scmp.ne.s32.totalorder %s110, %s113
      %p122 = scmp.eq.s32.totalorder %s39, 1
      %p123 = por %p121, %p122
      %p124 = scmp.ne.s32.totalorder %s113, %s114
      %p125 = scmp.eq.s32.totalorder %s39, 0
      %p126 = por %p124, %p125
      %p127 = scmp.ne.s32.totalorder %s113, %s114
      %p128 = scmp.eq.s32.totalorder %s40, 1
      %p129 = por %p127, %p128
      %p131 = scmp.ne.s32.totalorder %s114, %s130
      %p132 = scmp.eq.s32.totalorder %s40, 0
      %p133 = por %p131, %p132
      %s134 = ssub.s32 %s41, %s53
      %p135 = scmp.eq.s32.totalorder %s134, 0
      %s137 = sadd.s32 %s136, 1
      %s138 = scalar_select %p135, %s136, %s137
      %p141 = pneg %p135
      %p142 = scmp.eq.s32.totalorder %s34, 1
      %p143 = por %p141, %p142
      %p144 = scmp.ne.s32.totalorder %s136, %s139
      %p145 = scmp.eq.s32.totalorder %s34, 0
      %p146 = por %p144, %p145
      %p147 = scmp.ne.s32.totalorder %s136, %s139
      %p148 = scmp.eq.s32.totalorder %s39, 1
      %p149 = por %p147, %p148
      %p150 = scmp.ne.s32.totalorder %s139, %s140
      %p151 = scmp.eq.s32.totalorder %s39, 0
      %p152 = por %p150, %p151
      %p153 = scmp.ne.s32.totalorder %s139, %s140
      %p154 = scmp.eq.s32.totalorder %s40, 1
      %p155 = por %p153, %p154
      %p157 = scmp.ne.s32.totalorder %s140, %s156
      %p158 = scmp.eq.s32.totalorder %s40, 0
      %p159 = por %p157, %p158
      %s160 = ssub.s32 %s41, %s53
      %p161 = scmp.eq.s32.totalorder %s160, 0
      %s163 = sadd.s32 %s162, 1
      %s164 = scalar_select %p161, %s162, %s163
      %p167 = pneg %p161
      %p168 = scmp.eq.s32.totalorder %s34, 1
      %p169 = por %p167, %p168
      %p170 = scmp.ne.s32.totalorder %s162, %s165
      %p171 = scmp.eq.s32.totalorder %s34, 0
      %p172 = por %p170, %p171
      %p173 = scmp.ne.s32.totalorder %s162, %s165
      %p174 = scmp.eq.s32.totalorder %s39, 1
      %p175 = por %p173, %p174
      %p176 = scmp.ne.s32.totalorder %s165, %s166
      %p177 = scmp.eq.s32.totalorder %s39, 0
      %p178 = por %p176, %p177
      %p179 = scmp.ne.s32.totalorder %s165, %s166
      %p180 = scmp.eq.s32.totalorder %s40, 1
      %p181 = por %p179, %p180
      %p183 = scmp.ne.s32.totalorder %s166, %s182
      %p184 = scmp.eq.s32.totalorder %s40, 0
      %p185 = por %p183, %p184
      %s186 = ssub.s32 %s41, %s53
      %p187 = scmp.eq.s32.totalorder %s186, 0
      %s189 = sadd.s32 %s188, 1
      %s190 = scalar_select %p187, %s188, %s189
      %p193 = pneg %p187
      %p194 = scmp.eq.s32.totalorder %s34, 1
      %p195 = por %p193, %p194
      %p196 = scmp.ne.s32.totalorder %s188, %s191
      %p197 = scmp.eq.s32.totalorder %s34, 0
      %p198 = por %p196, %p197
      %p199 = scmp.ne.s32.totalorder %s188, %s191
      %p200 = scmp.eq.s32.totalorder %s39, 1
      %p201 = por %p199, %p200
      %p202 = scmp.ne.s32.totalorder %s191, %s192
      %p203 = scmp.eq.s32.totalorder %s39, 0
      %p204 = por %p202, %p203
      %p205 = scmp.ne.s32.totalorder %s191, %s192
      %p206 = scmp.eq.s32.totalorder %s40, 1
      %p207 = por %p205, %p206
      %p209 = scmp.ne.s32.totalorder %s192, %s208
      %p210 = scmp.eq.s32.totalorder %s40, 0
      %p211 = por %p209, %p210
      %s212 = ssub.s32 %s41, %s53
      %p213 = scmp.eq.s32.totalorder %s212, 0
      %s215 = sadd.s32 %s214, 1
      %s216 = scalar_select %p213, %s214, %s215
      %p219 = pneg %p213
      %p220 = scmp.eq.s32.totalorder %s34, 1
      %p221 = por %p219, %p220
      %p222 = scmp.ne.s32.totalorder %s214, %s217
      %p223 = scmp.eq.s32.totalorder %s34, 0
      %p224 = por %p222, %p223
      %p225 = scmp.ne.s32.totalorder %s214, %s217
      %p226 = scmp.eq.s32.totalorder %s39, 1
      %p227 = por %p225, %p226
      %p228 = scmp.ne.s32.totalorder %s217, %s218
      %p229 = scmp.eq.s32.totalorder %s39, 0
      %p230 = por %p228, %p229
      %p231 = scmp.ne.s32.totalorder %s217, %s218
      %p232 = scmp.eq.s32.totalorder %s40, 1
      %p233 = por %p231, %p232
      %p235 = scmp.ne.s32.totalorder %s218, %s234
      %p236 = scmp.eq.s32.totalorder %s40, 0
      %p237 = por %p235, %p236
      %s238 = ssub.s32 %s41, %s53
      %p239 = scmp.eq.s32.totalorder %s238, 0
      %s241 = sadd.s32 %s240, 1
      %s242 = scalar_select %p239, %s240, %s241
      %p245 = pneg %p239
      %p246 = scmp.eq.s32.totalorder %s34, 1
      %p247 = por %p245, %p246
      %p248 = scmp.ne.s32.totalorder %s240, %s243
      %p249 = scmp.eq.s32.totalorder %s34, 0
      %p250 = por %p248, %p249
      %p251 = scmp.ne.s32.totalorder %s240, %s243
      %p252 = scmp.eq.s32.totalorder %s39, 1
      %p253 = por %p251, %p252
      %p254 = scmp.ne.s32.totalorder %s243, %s244
      %p255 = scmp.eq.s32.totalorder %s39, 0
      %p256 = por %p254, %p255
      %p257 = scmp.ne.s32.totalorder %s243, %s244
      %p258 = scmp.eq.s32.totalorder %s40, 1
      %p259 = por %p257, %p258
      %p261 = scmp.ne.s32.totalorder %s244, %s260
      %p262 = scmp.eq.s32.totalorder %s40, 0
      %p263 = por %p261, %p262
      %s264 = ssub.s32 %s41, %s53
      %p265 = scmp.eq.s32.totalorder %s264, 0
      %s267 = sadd.s32 %s266, 1
      %s268 = scalar_select %p265, %s266, %s267
      %p271 = pneg %p265
      %p272 = scmp.eq.s32.totalorder %s34, 1
      %p273 = por %p271, %p272
      %p274 = scmp.ne.s32.totalorder %s266, %s269
      %p275 = scmp.eq.s32.totalorder %s34, 0
      %p276 = por %p274, %p275
      %p277 = scmp.ne.s32.totalorder %s266, %s269
      %p278 = scmp.eq.s32.totalorder %s39, 1
      %p279 = por %p277, %p278
      %p280 = scmp.ne.s32.totalorder %s269, %s270
      %p281 = scmp.eq.s32.totalorder %s39, 0
      %p282 = por %p280, %p281
      %p283 = scmp.ne.s32.totalorder %s269, %s270
      %p284 = scmp.eq.s32.totalorder %s40, 1
      %p285 = por %p283, %p284
      %p287 = scmp.ne.s32.totalorder %s270, %s286
      %p288 = scmp.eq.s32.totalorder %s40, 0
      %p289 = por %p287, %p288
      %s291 = sadd.s32 %s290, 1
      %p294 = scmp.eq.s32.totalorder %s34, 1
      %p295 = scmp.ne.s32.totalorder %s290, %s292
      %p296 = scmp.eq.s32.totalorder %s34, 0
      %p297 = por %p295, %p296
      %p298 = scmp.ne.s32.totalorder %s290, %s292
      %p299 = scmp.eq.s32.totalorder %s39, 1
      %p300 = por %p298, %p299
      %p301 = scmp.ne.s32.totalorder %s292, %s293
      %p302 = scmp.eq.s32.totalorder %s39, 0
      %p303 = por %p301, %p302
      %p304 = scmp.ne.s32.totalorder %s292, %s293
      %p305 = scmp.eq.s32.totalorder %s40, 1
      %p306 = por %p304, %p305
      %p308 = scmp.ne.s32.totalorder %s293, %s307
      %p309 = scmp.eq.s32.totalorder %s40, 0
      %p310 = por %p308, %p309
      %s312 = sadd.s32 %s311, 1
      %p315 = scmp.eq.s32.totalorder %s34, 1
      %p316 = scmp.ne.s32.totalorder %s311, %s313
      %p317 = scmp.eq.s32.totalorder %s34, 0
      %p318 = por %p316, %p317
      %p319 = scmp.ne.s32.totalorder %s311, %s313
      %p320 = scmp.eq.s32.totalorder %s39, 1
      %p321 = por %p319, %p320
      %p322 = scmp.ne.s32.totalorder %s313, %s314
      %p323 = scmp.eq.s32.totalorder %s39, 0
      %p324 = por %p322, %p323
      %p325 = scmp.ne.s32.totalorder %s313, %s314
      %p326 = scmp.eq.s32.totalorder %s40, 1
      %p327 = por %p325, %p326
      %p329 = scmp.ne.s32.totalorder %s314, %s328
      %p330 = scmp.eq.s32.totalorder %s40, 0
      %p331 = por %p329, %p330
      %s332 = ssub.s32 %s41, %s53
      %s333 = ssub.s32 %s42, %s49
      %s334 = sor.u32 %s332, %s333
      %p335 = scmp.eq.s32.totalorder %s334, 0
      %s337 = sadd.s32 %s336, 1
      %s338 = scalar_select %p335, %s336, %s337
      %p341 = pneg %p335
      %p342 = scmp.eq.s32.totalorder %s34, 1
      %p343 = por %p341, %p342
      %p344 = scmp.ne.s32.totalorder %s336, %s339
      %p345 = scmp.eq.s32.totalorder %s34, 0
      %p346 = por %p344, %p345
      %p347 = scmp.ne.s32.totalorder %s336, %s339
      %p348 = scmp.eq.s32.totalorder %s39, 1
      %p349 = por %p347, %p348
      %p350 = scmp.ne.s32.totalorder %s339, %s340
      %p351 = scmp.eq.s32.totalorder %s39, 0
      %p352 = por %p350, %p351
      %p353 = scmp.ne.s32.totalorder %s339, %s340
      %p354 = scmp.eq.s32.totalorder %s40, 1
      %p355 = por %p353, %p354
      %p357 = scmp.ne.s32.totalorder %s340, %s356
      %p358 = scmp.eq.s32.totalorder %s40, 0
      %p359 = por %p357, %p358
      %s360 = ssub.s32 %s41, %s53
      %s361 = ssub.s32 %s42, %s49
      %s362 = sor.u32 %s360, %s361
      %p363 = scmp.eq.s32.totalorder %s362, 0
      %s365 = sadd.s32 %s364, 1
      %s366 = scalar_select %p363, %s364, %s365
      %p369 = pneg %p363
      %p370 = scmp.eq.s32.totalorder %s34, 1
      %p371 = por %p369, %p370
      %p372 = scmp.ne.s32.totalorder %s364, %s367
      %p373 = scmp.eq.s32.totalorder %s34, 0
      %p374 = por %p372, %p373
      %p375 = scmp.ne.s32.totalorder %s364, %s367
      %p376 = scmp.eq.s32.totalorder %s39, 1
      %p377 = por %p375, %p376
      %p378 = scmp.ne.s32.totalorder %s367, %s368
      %p379 = scmp.eq.s32.totalorder %s39, 0
      %p380 = por %p378, %p379
      %p381 = scmp.ne.s32.totalorder %s367, %s368
      %p382 = scmp.eq.s32.totalorder %s40, 1
      %p383 = por %p381, %p382
      %p385 = scmp.ne.s32.totalorder %s368, %s384
      %p386 = scmp.eq.s32.totalorder %s40, 0
      %p387 = por %p385, %p386
      %p388 = scmp.le.s32.totalorder 1, %s34
      %p389 = scmp.lt.s32.totalorder %s34, 3
      %p390 = pnand %p388, %p389
      %p391 = pneg %p390
      // Predicated region
      $region9: #{_run_pallas.1} parent=5 // pred_check
        _
      $region10: #{_run_pallas.1} parent=5 // pred_check_branch
        %393 = sbr.rel (%p390) target = $region12
      $region11: #{_run_pallas.1} parent=5 // pred_region
        %s394 = ssub.s32 %s34, 1
        // Predicated region
        $region13: #{_run_pallas.1} parent=11 // pred_check
          %p395 = pneg %p303
        $region14: #{_run_pallas.1} parent=11 // pred_check_branch
          %397 = sbr.rel (%p395) target = $region16
        $region15: #{_run_pallas.1} parent=11 // pred_region
          _
        $region16: #{_run_pallas.1} parent=11 // pred_fallthru
          _
        // Predicated region
        $region17: #{_run_pallas.1} parent=11 // pred_check
          %p398 = pneg %p324
        $region18: #{_run_pallas.1} parent=11 // pred_check_branch
          %400 = sbr.rel (%p398) target = $region20
        $region19: #{_run_pallas.1} parent=11 // pred_region
          _
        $region20: #{_run_pallas.1} parent=11 // pred_fallthru
          _
      $region12: #{_run_pallas.1} parent=5 // pred_fallthru
        _
      %p401 = scmp.lt.s32.totalorder %s34, 2
      // Predicated region
      $region21: #{_run_pallas.1} parent=5 // pred_check
        %p402 = pneg %p401
      $region22: #{_run_pallas.1} parent=5 // pred_check_branch
        %404 = sbr.rel (%p402) target = $region24
      $region23: #{_run_pallas.1} parent=5 // pred_region
        // Predicated region
        $region25: #{_run_pallas.1} parent=23 // pred_check
          %p405 = pneg %p68
        $region26: #{_run_pallas.1} parent=23 // pred_check_branch
          %407 = sbr.rel (%p405) target = $region28
        $region27: #{_run_pallas.1} parent=23 // pred_region
          %s408 = sand.u32 %s58, 1
          %s409 = scalar_lea.sflag [#allocation4], %s408
          %s410 = sand.u32 %s58, 1
          %s411 = smul.addr %s410, 16
          %s412 = scalar_lea.vmem [#allocation3], %s411
          %s413 = smul.u32 2, %s42
          %s415 = ssub.s32 256, 256
          %416 = vsyncadd %s409, %s415
          %s417 = smul.addr %s41, 2
          %s418 = sadd.s32 %s413, %s417
          %s419 = smul.addr %s418, 128
          %s420 = scalar_lea.hbm %s0, %s419
          %s421 = sshll.u32 %s412, 4
          %s422 = int_to_ptr.vmem [resolvable:$true] %s421
          %427 = dma.hbm_to_vmem [thread:$0]  %s420, 256, %s422, %s409, 128, 128, 8
        $region28: #{_run_pallas.1} parent=23 // pred_fallthru
          _
        // Predicated region
        $region29: #{_run_pallas.1} parent=23 // pred_check
          %p428 = pneg %p94
        $region30: #{_run_pallas.1} parent=23 // pred_check_branch
          %430 = sbr.rel (%p428) target = $region32
        $region31: #{_run_pallas.1} parent=23 // pred_region
          %s431 = sand.u32 %s34, 1
          %s432 = scalar_lea.sflag [#allocation7], %s431
          %s433 = sand.u32 %s84, 1
          %s434 = smul.addr %s433, 32
          %s435 = scalar_lea.vmem [#allocation6], %s434
          %s437 = ssub.s32 512, 512
          %438 = vsyncadd %s432, %s437
          %s439 = smul.addr %s41, 4
          %s440 = smul.addr %s439, 128
          %s441 = scalar_lea.hbm %s1, %s440
          %s442 = sshll.u32 %s435, 4
          %s443 = int_to_ptr.vmem [resolvable:$true] %s442
          %448 = dma.hbm_to_vmem [thread:$0]  %s441, 512, %s443, %s432, 128, 128, 8
        $region32: #{_run_pallas.1} parent=23 // pred_fallthru
          _
        // Predicated region
        $region33: #{_run_pallas.1} parent=23 // pred_check
          %p449 = pneg %p120
        $region34: #{_run_pallas.1} parent=23 // pred_check_branch
          %451 = sbr.rel (%p449) target = $region36
        $region35: #{_run_pallas.1} parent=23 // pred_region
          %p452 = scmp.lt.s32.totalorder %s41, 1
          %s453 = scalar_select %p452, %s41, 1
          %s454 = scalar_lea.vmem %s2, %s453
        $region36: #{_run_pallas.1} parent=23 // pred_fallthru
          _
        // Predicated region
        $region37: #{_run_pallas.1} parent=23 // pred_check
          %p455 = pneg %p146
        $region38: #{_run_pallas.1} parent=23 // pred_check_branch
          %457 = sbr.rel (%p455) target = $region40
        $region39: #{_run_pallas.1} parent=23 // pred_region
          %s458 = sand.u32 %s34, 1
          %s459 = scalar_lea.sflag [#allocation7], %s458
          %s460 = sand.u32 %s136, 1
          %s461 = smul.addr %s460, 32
          %s462 = scalar_lea.vmem [#allocation8], %s461
          %s464 = ssub.s32 512, 512
          %465 = vsyncadd %s459, %s464
          %s466 = smul.addr %s41, 4
          %s467 = smul.addr %s466, 128
          %s468 = scalar_lea.hbm %s3, %s467
          %s469 = sshll.u32 %s462, 4
          %s470 = int_to_ptr.vmem [resolvable:$true] %s469
          %475 = dma.hbm_to_vmem [thread:$0]  %s468, 512, %s470, %s459, 128, 128, 8
        $region40: #{_run_pallas.1} parent=23 // pred_fallthru
          _
        // Predicated region
        $region41: #{_run_pallas.1} parent=23 // pred_check
          %p476 = pneg %p172
        $region42: #{_run_pallas.1} parent=23 // pred_check_branch
          %478 = sbr.rel (%p476) target = $region44
        $region43: #{_run_pallas.1} parent=23 // pred_region
          %p479 = scmp.lt.s32.totalorder %s41, 1
          %s480 = scalar_select %p479, %s41, 1
          %s481 = scalar_lea.vmem %s4, %s480
        $region44: #{_run_pallas.1} parent=23 // pred_fallthru
          _
        // Predicated region
        $region45: #{_run_pallas.1} parent=23 // pred_check
          %p482 = pneg %p198
        $region46: #{_run_pallas.1} parent=23 // pred_check_branch
          %484 = sbr.rel (%p482) target = $region48
        $region47: #{_run_pallas.1} parent=23 // pred_region
          %s485 = sand.u32 %s34, 1
          %s486 = scalar_lea.sflag [#allocation10], %s485
          %s487 = sand.u32 %s188, 1
          %s488 = smul.addr %s487, 32
          %s489 = scalar_lea.vmem [#allocation9], %s488
          %s491 = ssub.s32 512, 512
          %492 = vsyncadd %s486, %s491
          %s493 = smul.addr %s41, 4
          %s494 = smul.addr %s493, 128
          %s495 = scalar_lea.hbm %s5, %s494
          %s496 = sshll.u32 %s489, 4
          %s497 = int_to_ptr.vmem [resolvable:$true] %s496
          %502 = dma.hbm_to_vmem [thread:$0]  %s495, 512, %s497, %s486, 128, 128, 8
        $region48: #{_run_pallas.1} parent=23 // pred_fallthru
          _
        // Predicated region
        $region49: #{_run_pallas.1} parent=23 // pred_check
          %p503 = pneg %p224
        $region50: #{_run_pallas.1} parent=23 // pred_check_branch
          %505 = sbr.rel (%p503) target = $region52
        $region51: #{_run_pallas.1} parent=23 // pred_region
          %p506 = scmp.lt.s32.totalorder %s41, 1
          %s507 = scalar_select %p506, %s41, 1
          %s508 = scalar_lea.vmem %s6, %s507
        $region52: #{_run_pallas.1} parent=23 // pred_fallthru
          _
        // Predicated region
        $region53: #{_run_pallas.1} parent=23 // pred_check
          %p509 = pneg %p250
        $region54: #{_run_pallas.1} parent=23 // pred_check_branch
          %511 = sbr.rel (%p509) target = $region56
        $region55: #{_run_pallas.1} parent=23 // pred_region
          %s512 = sand.u32 %s34, 1
          %s513 = scalar_lea.sflag [#allocation10], %s512
          %s514 = sand.u32 %s240, 1
          %s515 = smul.addr %s514, 32
          %s516 = scalar_lea.vmem [#allocation11], %s515
          %s518 = ssub.s32 512, 512
          %519 = vsyncadd %s513, %s518
          %s520 = smul.addr %s41, 4
          %s521 = smul.addr %s520, 128
          %s522 = scalar_lea.hbm %s7, %s521
          %s523 = sshll.u32 %s516, 4
          %s524 = int_to_ptr.vmem [resolvable:$true] %s523
          %529 = dma.hbm_to_vmem [thread:$0]  %s522, 512, %s524, %s513, 128, 128, 8
        $region56: #{_run_pallas.1} parent=23 // pred_fallthru
          _
        // Predicated region
        $region57: #{_run_pallas.1} parent=23 // pred_check
          %p530 = pneg %p276
        $region58: #{_run_pallas.1} parent=23 // pred_check_branch
          %532 = sbr.rel (%p530) target = $region60
        $region59: #{_run_pallas.1} parent=23 // pred_region
          %p533 = scmp.lt.s32.totalorder %s41, 1
          %s534 = scalar_select %p533, %s41, 1
          %s535 = scalar_lea.vmem %s8, %s534
        $region60: #{_run_pallas.1} parent=23 // pred_fallthru
          _
      $region24: #{_run_pallas.1} parent=5 // pred_fallthru
        _
      %p536 = scmp.le.s32.totalorder 1, %s34
      %p537 = scmp.lt.s32.totalorder %s34, 3
      %p538 = pnand %p536, %p537
      %p539 = pneg %p538
      // Predicated region
      $region61: #{_run_pallas.1} parent=5 // pred_check
        _
      $region62: #{_run_pallas.1} parent=5 // pred_check_branch
        %541 = sbr.rel (%p538) target = $region64
      $region63: #{_run_pallas.1} parent=5 // pred_region
        %s542 = ssub.s32 %s34, 1
        %s543 = sand.u32 %s61, 1
        %s544 = scalar_lea.sflag [#allocation4], %s543
        %s545 = sand.u32 %s61, 1
        %s546 = smul.addr %s545, 16
        %s547 = scalar_lea.vmem [#allocation3], %s546
        // Predicated region
        $region65: #{_run_pallas.1} parent=63 // pred_check
          %p548 = pneg %p74
        $region66: #{_run_pallas.1} parent=63 // pred_check_branch
          %550 = sbr.rel (%p548) target = $region68
        $region67: #{_run_pallas.1} parent=63 // pred_region
          %551 = dma.done %s544, 256
        $region68: #{_run_pallas.1} parent=63 // pred_fallthru
          _
        %s552 = sand.u32 %s39, 1
        %s553 = scalar_lea.sflag [#allocation7], %s552
        %s554 = sand.u32 %s87, 1
        %s555 = smul.addr %s554, 32
        %s556 = scalar_lea.vmem [#allocation6], %s555
        // Predicated region
        $region69: #{_run_pallas.1} parent=63 // pred_check
          %p557 = pneg %p100
        $region70: #{_run_pallas.1} parent=63 // pred_check_branch
          %559 = sbr.rel (%p557) target = $region72
        $region71: #{_run_pallas.1} parent=63 // pred_region
          %560 = dma.done %s553, 512
        $region72: #{_run_pallas.1} parent=63 // pred_fallthru
          _
        %s561 = sand.u32 %s39, 1
        %s562 = scalar_lea.sflag [#allocation7], %s561
        %s563 = sand.u32 %s139, 1
        %s564 = smul.addr %s563, 32
        %s565 = scalar_lea.vmem [#allocation8], %s564
        // Predicated region
        $region73: #{_run_pallas.1} parent=63 // pred_check
          %p566 = pneg %p152
        $region74: #{_run_pallas.1} parent=63 // pred_check_branch
          %568 = sbr.rel (%p566) target = $region76
        $region75: #{_run_pallas.1} parent=63 // pred_region
          %569 = dma.done %s562, 512
        $region76: #{_run_pallas.1} parent=63 // pred_fallthru
          _
        %s570 = sand.u32 %s39, 1
        %s571 = scalar_lea.sflag [#allocation10], %s570
        %s572 = sand.u32 %s191, 1
        %s573 = smul.addr %s572, 32
        %s574 = scalar_lea.vmem [#allocation9], %s573
        // Predicated region
        $region77: #{_run_pallas.1} parent=63 // pred_check
          %p575 = pneg %p204
        $region78: #{_run_pallas.1} parent=63 // pred_check_branch
          %577 = sbr.rel (%p575) target = $region80
        $region79: #{_run_pallas.1} parent=63 // pred_region
          %578 = dma.done %s571, 512
        $region80: #{_run_pallas.1} parent=63 // pred_fallthru
          _
        %s579 = sand.u32 %s39, 1
        %s580 = scalar_lea.sflag [#allocation10], %s579
        %s581 = sand.u32 %s243, 1
        %s582 = smul.addr %s581, 32
        %s583 = scalar_lea.vmem [#allocation11], %s582
        // Predicated region
        $region81: #{_run_pallas.1} parent=63 // pred_check
          %p584 = pneg %p256
        $region82: #{_run_pallas.1} parent=63 // pred_check_branch
          %586 = sbr.rel (%p584) target = $region84
        $region83: #{_run_pallas.1} parent=63 // pred_region
          %587 = dma.done %s580, 512
        $region84: #{_run_pallas.1} parent=63 // pred_fallthru
          _
        %s588 = sand.u32 %s61, 1
        %s589 = scalar_lea.sflag [#allocation4], %s588
        %s590 = sand.u32 %s61, 1
        %s591 = smul.addr %s590, 16
        %s592 = scalar_lea.vmem [#allocation3], %s591
        %p593 = pneg %p74
        %p594 = pneg %p71
        %s595 = sand.u32 %s39, 1
        %s596 = scalar_lea.sflag [#allocation7], %s595
        %s597 = sand.u32 %s87, 1
        %s598 = smul.addr %s597, 32
        %s599 = scalar_lea.vmem [#allocation6], %s598
        %p600 = pneg %p100
        %p601 = pneg %p97
        %p602 = scmp.lt.s32.totalorder %s43, 1
        %s603 = scalar_select %p602, %s43, 1
        %s604 = scalar_lea.vmem %s2, %s603
        %p605 = pneg %p126
        %p606 = pneg %p123
        %s607 = sand.u32 %s39, 1
        %s608 = scalar_lea.sflag [#allocation7], %s607
        %s609 = sand.u32 %s139, 1
        %s610 = smul.addr %s609, 32
        %s611 = scalar_lea.vmem [#allocation8], %s610
        %p612 = pneg %p152
        %p613 = pneg %p149
        %p614 = scmp.lt.s32.totalorder %s43, 1
        %s615 = scalar_select %p614, %s43, 1
        %s616 = scalar_lea.vmem %s4, %s615
        %p617 = pneg %p178
        %p618 = pneg %p175
        %s619 = sand.u32 %s39, 1
        %s620 = scalar_lea.sflag [#allocation10], %s619
        %s621 = sand.u32 %s191, 1
        %s622 = smul.addr %s621, 32
        %s623 = scalar_lea.vmem [#allocation9], %s622
        %p624 = pneg %p204
        %p625 = pneg %p201
        %p626 = scmp.lt.s32.totalorder %s43, 1
        %s627 = scalar_select %p626, %s43, 1
        %s628 = scalar_lea.vmem %s6, %s627
        %p629 = pneg %p230
        %p630 = pneg %p227
        %s631 = sand.u32 %s39, 1
        %s632 = scalar_lea.sflag [#allocation10], %s631
        %s633 = sand.u32 %s243, 1
        %s634 = smul.addr %s633, 32
        %s635 = scalar_lea.vmem [#allocation11], %s634
        %p636 = pneg %p256
        %p637 = pneg %p253
        %p638 = scmp.lt.s32.totalorder %s43, 1
        %s639 = scalar_select %p638, %s43, 1
        %s640 = scalar_lea.vmem %s8, %s639
        %p641 = pneg %p282
        %p642 = pneg %p279
        %p643 = pneg %p303
        %p644 = pneg %p300
        %p645 = pneg %p324
        %p646 = pneg %p321
        %p647 = pneg %p352
        %p648 = pneg %p349
        %s649 = sand.u32 %s339, 1
        %s650 = scalar_lea.sflag [#allocation5], %s649
        %s651 = sand.u32 %s339, 1
        %s652 = smul.addr %s651, 16
        %s653 = scalar_lea.vmem [#allocation12], %s652
        %p654 = pneg %p380
        %p655 = pneg %p377
        %s656 = sand.u32 %s367, 1
        %s657 = scalar_lea.sflag [#allocation14], %s656
        %s658 = sand.u32 %s367, 1
        %s659 = smul.addr %s658, 64
        %s660 = scalar_lea.vmem [#allocation13], %s659
        %s661 = smul.u32 2, %s44
        %p662 = scmp.lt.s32.totalorder %s43, 1
        %s663 = scalar_select %p662, %s43, 1
        %s664 = scalar_lea.vmem %s2, %s663
        %p665 = scmp.lt.s32.totalorder %s43, 1
        %s666 = scalar_select %p665, %s43, 1
        %s667 = scalar_lea.vmem %s4, %s666
        %p668 = scmp.lt.s32.totalorder %s43, 1
        %s669 = scalar_select %p668, %s43, 1
        %s670 = scalar_lea.vmem %s6, %s669
        %p671 = scmp.lt.s32.totalorder %s43, 1
        %s672 = scalar_select %p671, %s43, 1
        %s673 = scalar_lea.vmem %s8, %s672
        %s674 = smul.u32 2, %s44
        %s675 = smul.u32 4, %s43
        %s676 = smul.u32 2, %s44
        %v677 = vld [vmem:[%s547] sm:$0xff]
        %v678 = vld [vmem:[%s547 + $0x8] sm:$0xff]
        %v679 = vld [vmem:[%s556] sm:$0xff]
        %v680 = vld [vmem:[%s556 + $0x8] sm:$0xff]
        %v681 = vld [vmem:[%s556 + $0x10] sm:$0xff]
        %v682 = vld [vmem:[%s556 + $0x18] sm:$0xff]
        %v683 = vld [vmem:[%s664] sm:$0x1]
        %v685 = vlaneseq
        %v686 = vshrl.u32 %v685, 7
        %v687 = vsub.s32 0, %v686
        %v688 = vrot.slane %v683, %v687
        %vm690 = vcmask 261120
        %v692 = vsel %vm690, %v677, 0
        %v695 = vsel %vm690, %v678, 0
        %697 = vmatprep.subr.mxu0 0.0
        %698 = vmatpush1.msra.mxu0 %v679
        %699 = vmatprep.subr.mxu0 0.0
        %700 = vmatpush1.msra.mxu0 %v680
        %701 = vmatprep.subr.mxu0 0.0
        %702 = vmatpush1.msra.mxu0 %v681
        %703 = vmatprep.subr.mxu0 0.0
        %704 = vmatpush1.msra.mxu0 %v682
        %705 = vmatprep.subr.mxu0 0.0
        %706 = vmatpush1.msra.mxu0 0.0
        %707 = vmatprep.subr.mxu0 0.0
        %708 = vmatpush1.msra.mxu0 0.0
        %709 = vmatprep.subr.mxu0 0.0
        %710 = vmatpush1.msra.mxu0 0.0
        %711 = vmatprep.subr.mxu0 0.0
        %712 = vmatpush1.msra.mxu0 0.0
        %713 = vmatprep.subr.mxu0 0.0
        %714 = vmatpush1.msra.mxu0 0.0
        %715 = vmatprep.subr.mxu0 0.0
        %716 = vmatpush1.msra.mxu0 0.0
        %717 = vmatprep.subr.mxu0 0.0
        %718 = vmatpush1.msra.mxu0 0.0
        %719 = vmatprep.subr.mxu0 0.0
        %720 = vmatpush1.msra.mxu0 0.0
        %721 = vmatprep.subr.mxu0 0.0
        %722 = vmatpush1.msra.mxu0 0.0
        %723 = vmatprep.subr.mxu0 0.0
        %724 = vmatpush1.msra.mxu0 0.0
        %725 = vmatprep.subr.mxu0 0.0
        %726 = vmatpush1.msra.mxu0 0.0
        %727 = vmatprep.subr.mxu0 0.0
        %728 = vmatpush1.msra.mxu0 0.0
        %729 = vmatprep.subr.mxu0 0.0
        %730 = vmatpush1.msra.mxu0 0.0
        %731 = vmatprep.subr.mxu0 0.0
        %732 = vmatpush1.msra.mxu0 0.0
        %733 = vmatprep.subr.mxu0 0.0
        %734 = vmatpush1.msra.mxu0 0.0
        %735 = vmatprep.subr.mxu0 0.0
        %736 = vmatpush1.msra.mxu0 0.0
        %737 = vmatprep.subr.mxu0 0.0
        %738 = vmatpush1.msra.mxu0 0.0
        %739 = vmatprep.subr.mxu0 0.0
        %740 = vmatpush1.msra.mxu0 0.0
        %741 = vmatprep.subr.mxu0 0.0
        %742 = vmatpush1.msra.mxu0 0.0
        %743 = vmatprep.subr.mxu0 0.0
        %744 = vmatpush1.msra.mxu0 0.0
        %745 = vmatprep.subr.mxu0 0.0
        %746 = vmatpush1.msra.mxu0 0.0
        %747 = vmatprep.subr.mxu0 0.0
        %748 = vmatpush1.msra.mxu0 0.0
        %749 = vmatprep.subr.mxu0 0.0
        %750 = vmatpush1.msra.mxu0 0.0
        %751 = vmatprep.subr.mxu0 0.0
        %752 = vmatpush1.msra.mxu0 0.0
        %753 = vmatprep.subr.mxu0 0.0
        %754 = vmatpush1.msra.mxu0 0.0
        %755 = vmatprep.subr.mxu0 0.0
        %756 = vmatpush1.msra.mxu0 0.0
        %757 = vmatprep.subr.mxu0 0.0
        %758 = vmatpush1.msra.mxu0 0.0
        %759 = vmatprep.subr.mxu0 0.0
        %760 = vmatpush1.msra.mxu0 0.0
        %761 = vmatprep.mubr.f32.mxu0 0.0
        %762 = vmatmul.mubr.f32.gmra.mrb[0].mxu0 %v692
        %v763 = vpop.f32.mrb[0].mxu0
        %v764 = vadd.f32 %v688, %v763
        %v765 = vpop.f32.mrb[0].mxu0
        %766 = vmatprep.mubr.f32.mxu0 0.0
        %767 = vmatmul.mubr.f32.gmra.mrb[0].mxu0 %v695
        %v768 = vpop.f32.mrb[0].mxu0
        %v769 = vadd.f32 %v688, %v768
        %v770 = vpop.f32.mrb[0].mxu0
        %771 = vdwg.mxu0
        %v772 = vmul.f32 %v764, 0.35355338
        %v773 = vmul.f32 %v769, 0.35355338
        %v774 = vld [vmem:[%s565] sm:$0xff]
        %v775 = vld [vmem:[%s565 + $0x8] sm:$0xff]
        %v776 = vld [vmem:[%s565 + $0x10] sm:$0xff]
        %v777 = vld [vmem:[%s565 + $0x18] sm:$0xff]
        %v778 = vld [vmem:[%s667] sm:$0x1]
        %v780 = vlaneseq
        %v781 = vshrl.u32 %v780, 7
        %v782 = vsub.s32 0, %v781
        %v783 = vrot.slane %v778, %v782
        %785 = vmatprep.subr.mxu0 0.0
        %786 = vmatpush1.msra.mxu0 %v774
        %787 = vmatprep.subr.mxu0 0.0
        %788 = vmatpush1.msra.mxu0 %v775
        %789 = vmatprep.subr.mxu0 0.0
        %790 = vmatpush1.msra.mxu0 %v776
        %791 = vmatprep.subr.mxu0 0.0
        %792 = vmatpush1.msra.mxu0 %v777
        %793 = vmatprep.subr.mxu0 0.0
        %794 = vmatpush1.msra.mxu0 0.0
        %795 = vmatprep.subr.mxu0 0.0
        %796 = vmatpush1.msra.mxu0 0.0
        %797 = vmatprep.subr.mxu0 0.0
        %798 = vmatpush1.msra.mxu0 0.0
        %799 = vmatprep.subr.mxu0 0.0
        %800 = vmatpush1.msra.mxu0 0.0
        %801 = vmatprep.subr.mxu0 0.0
        %802 = vmatpush1.msra.mxu0 0.0
        %803 = vmatprep.subr.mxu0 0.0
        %804 = vmatpush1.msra.mxu0 0.0
        %805 = vmatprep.subr.mxu0 0.0
        %806 = vmatpush1.msra.mxu0 0.0
        %807 = vmatprep.subr.mxu0 0.0
        %808 = vmatpush1.msra.mxu0 0.0
        %809 = vmatprep.subr.mxu0 0.0
        %810 = vmatpush1.msra.mxu0 0.0
        %811 = vmatprep.subr.mxu0 0.0
        %812 = vmatpush1.msra.mxu0 0.0
        %813 = vmatprep.subr.mxu0 0.0
        %814 = vmatpush1.msra.mxu0 0.0
        %815 = vmatprep.subr.mxu0 0.0
        %816 = vmatpush1.msra.mxu0 0.0
        %817 = vmatprep.subr.mxu0 0.0
        %818 = vmatpush1.msra.mxu0 0.0
        %819 = vmatprep.subr.mxu0 0.0
        %820 = vmatpush1.msra.mxu0 0.0
        %821 = vmatprep.subr.mxu0 0.0
        %822 = vmatpush1.msra.mxu0 0.0
        %823 = vmatprep.subr.mxu0 0.0
        %824 = vmatpush1.msra.mxu0 0.0
        %825 = vmatprep.subr.mxu0 0.0
        %826 = vmatpush1.msra.mxu0 0.0
        %827 = vmatprep.subr.mxu0 0.0
        %828 = vmatpush1.msra.mxu0 0.0
        %829 = vmatprep.subr.mxu0 0.0
        %830 = vmatpush1.msra.mxu0 0.0
        %831 = vmatprep.subr.mxu0 0.0
        %832 = vmatpush1.msra.mxu0 0.0
        %833 = vmatprep.subr.mxu0 0.0
        %834 = vmatpush1.msra.mxu0 0.0
        %835 = vmatprep.subr.mxu0 0.0
        %836 = vmatpush1.msra.mxu0 0.0
        %837 = vmatprep.subr.mxu0 0.0
        %838 = vmatpush1.msra.mxu0 0.0
        %839 = vmatprep.subr.mxu0 0.0
        %840 = vmatpush1.msra.mxu0 0.0
        %841 = vmatprep.subr.mxu0 0.0
        %842 = vmatpush1.msra.mxu0 0.0
        %843 = vmatprep.subr.mxu0 0.0
        %844 = vmatpush1.msra.mxu0 0.0
        %845 = vmatprep.subr.mxu0 0.0
        %846 = vmatpush1.msra.mxu0 0.0
        %847 = vmatprep.subr.mxu0 0.0
        %848 = vmatpush1.msra.mxu0 0.0
        %849 = vmatprep.mubr.f32.mxu0 0.0
        %850 = vmatmul.mubr.f32.gmra.mrb[0].mxu0 %v692
        %v851 = vpop.f32.mrb[0].mxu0
        %v852 = vadd.f32 %v783, %v851
        %v853 = vpop.f32.mrb[0].mxu0
        %854 = vmatprep.mubr.f32.mxu0 0.0
        %855 = vmatmul.mubr.f32.gmra.mrb[0].mxu0 %v695
        %v856 = vpop.f32.mrb[0].mxu0
        %v857 = vadd.f32 %v783, %v856
        %v858 = vpop.f32.mrb[0].mxu0
        %859 = vdwg.mxu0
        %v860 = vld [vmem:[%s574] sm:$0xff]
        %v861 = vld [vmem:[%s574 + $0x8] sm:$0xff]
        %v862 = vld [vmem:[%s574 + $0x10] sm:$0xff]
        %v863 = vld [vmem:[%s574 + $0x18] sm:$0xff]
        %v864 = vld [vmem:[%s670] sm:$0x1]
        %v866 = vlaneseq
        %v867 = vshrl.u32 %v866, 7
        %v868 = vsub.s32 0, %v867
        %v869 = vrot.slane %v864, %v868
        %871 = vmatprep.subr.mxu0 0.0
        %872 = vmatpush1.msra.mxu0 %v860
        %873 = vmatprep.subr.mxu0 0.0
        %874 = vmatpush1.msra.mxu0 %v861
        %875 = vmatprep.subr.mxu0 0.0
        %876 = vmatpush1.msra.mxu0 %v862
        %877 = vmatprep.subr.mxu0 0.0
        %878 = vmatpush1.msra.mxu0 %v863
        %879 = vmatprep.subr.mxu0 0.0
        %880 = vmatpush1.msra.mxu0 0.0
        %881 = vmatprep.subr.mxu0 0.0
        %882 = vmatpush1.msra.mxu0 0.0
        %883 = vmatprep.subr.mxu0 0.0
        %884 = vmatpush1.msra.mxu0 0.0
        %885 = vmatprep.subr.mxu0 0.0
        %886 = vmatpush1.msra.mxu0 0.0
        %887 = vmatprep.subr.mxu0 0.0
        %888 = vmatpush1.msra.mxu0 0.0
        %889 = vmatprep.subr.mxu0 0.0
        %890 = vmatpush1.msra.mxu0 0.0
        %891 = vmatprep.subr.mxu0 0.0
        %892 = vmatpush1.msra.mxu0 0.0
        %893 = vmatprep.subr.mxu0 0.0
        %894 = vmatpush1.msra.mxu0 0.0
        %895 = vmatprep.subr.mxu0 0.0
        %896 = vmatpush1.msra.mxu0 0.0
        %897 = vmatprep.subr.mxu0 0.0
        %898 = vmatpush1.msra.mxu0 0.0
        %899 = vmatprep.subr.mxu0 0.0
        %900 = vmatpush1.msra.mxu0 0.0
        %901 = vmatprep.subr.mxu0 0.0
        %902 = vmatpush1.msra.mxu0 0.0
        %903 = vmatprep.subr.mxu0 0.0
        %904 = vmatpush1.msra.mxu0 0.0
        %905 = vmatprep.subr.mxu0 0.0
        %906 = vmatpush1.msra.mxu0 0.0
        %907 = vmatprep.subr.mxu0 0.0
        %908 = vmatpush1.msra.mxu0 0.0
        %909 = vmatprep.subr.mxu0 0.0
        %910 = vmatpush1.msra.mxu0 0.0
        %911 = vmatprep.subr.mxu0 0.0
        %912 = vmatpush1.msra.mxu0 0.0
        %913 = vmatprep.subr.mxu0 0.0
        %914 = vmatpush1.msra.mxu0 0.0
        %915 = vmatprep.subr.mxu0 0.0
        %916 = vmatpush1.msra.mxu0 0.0
        %917 = vmatprep.subr.mxu0 0.0
        %918 = vmatpush1.msra.mxu0 0.0
        %919 = vmatprep.subr.mxu0 0.0
        %920 = vmatpush1.msra.mxu0 0.0
        %921 = vmatprep.subr.mxu0 0.0
        %922 = vmatpush1.msra.mxu0 0.0
        %923 = vmatprep.subr.mxu0 0.0
        %924 = vmatpush1.msra.mxu0 0.0
        %925 = vmatprep.subr.mxu0 0.0
        %926 = vmatpush1.msra.mxu0 0.0
        %927 = vmatprep.subr.mxu0 0.0
        %928 = vmatpush1.msra.mxu0 0.0
        %929 = vmatprep.subr.mxu0 0.0
        %930 = vmatpush1.msra.mxu0 0.0
        %931 = vmatprep.subr.mxu0 0.0
        %932 = vmatpush1.msra.mxu0 0.0
        %933 = vmatprep.subr.mxu0 0.0
        %934 = vmatpush1.msra.mxu0 0.0
        %935 = vmatprep.mubr.f32.mxu0 0.0
        %936 = vmatmul.mubr.f32.gmra.mrb[0].mxu0 %v692
        %v937 = vpop.f32.mrb[0].mxu0
        %v938 = vadd.f32 %v869, %v937
        %v939 = vpop.f32.mrb[0].mxu0
        %940 = vmatprep.mubr.f32.mxu0 0.0
        %941 = vmatmul.mubr.f32.gmra.mrb[0].mxu0 %v695
        %v942 = vpop.f32.mrb[0].mxu0
        %v943 = vadd.f32 %v869, %v942
        %v944 = vpop.f32.mrb[0].mxu0
        %945 = vdwg.mxu0
        %vm946 = vcmask 64512
        %v948 = vsel %vm946, %v772, 0
        %v951 = vsel %vm946, %v852, 0
        %953 = vmatprep.subr.mxu0 0.0
        %954 = vmatpush1.xpose.msra.mxu0 %v951
        %955 = vmatprep.subr.mxu0 0.0
        %956 = vmatpush1.xpose.msra.mxu0 0.0
        %957 = vmatprep.subr.mxu0 0.0
        %958 = vmatpush1.xpose.msra.mxu0 0.0
        %959 = vmatprep.subr.mxu0 0.0
        %960 = vmatpush1.xpose.msra.mxu0 0.0
        %961 = vmatprep.subr.mxu0 0.0
        %962 = vmatpush1.xpose.msra.mxu0 0.0
        %963 = vmatprep.subr.mxu0 0.0
        %964 = vmatpush1.xpose.msra.mxu0 0.0
        %965 = vmatprep.subr.mxu0 0.0
        %966 = vmatpush1.xpose.msra.mxu0 0.0
        %967 = vmatprep.subr.mxu0 0.0
        %968 = vmatpush1.xpose.msra.mxu0 0.0
        %969 = vmatprep.subr.mxu0 0.0
        %970 = vmatpush1.xpose.msra.mxu0 0.0
        %971 = vmatprep.subr.mxu0 0.0
        %972 = vmatpush1.xpose.msra.mxu0 0.0
        %973 = vmatprep.subr.mxu0 0.0
        %974 = vmatpush1.xpose.msra.mxu0 0.0
        %975 = vmatprep.subr.mxu0 0.0
        %976 = vmatpush1.xpose.msra.mxu0 0.0
        %977 = vmatprep.subr.mxu0 0.0
        %978 = vmatpush1.xpose.msra.mxu0 0.0
        %979 = vmatprep.subr.mxu0 0.0
        %980 = vmatpush1.xpose.msra.mxu0 0.0
        %981 = vmatprep.subr.mxu0 0.0
        %982 = vmatpush1.xpose.msra.mxu0 0.0
        %983 = vmatprep.subr.mxu0 0.0
        %984 = vmatpush1.xpose.msra.mxu0 0.0
        %985 = vmatprep.subr.mxu0 0.0
        %986 = vmatpush1.xpose.msra.mxu0 0.0
        %987 = vmatprep.subr.mxu0 0.0
        %988 = vmatpush1.xpose.msra.mxu0 0.0
        %989 = vmatprep.subr.mxu0 0.0
        %990 = vmatpush1.xpose.msra.mxu0 0.0
        %991 = vmatprep.subr.mxu0 0.0
        %992 = vmatpush1.xpose.msra.mxu0 0.0
        %993 = vmatprep.subr.mxu0 0.0
        %994 = vmatpush1.xpose.msra.mxu0 0.0
        %995 = vmatprep.subr.mxu0 0.0
        %996 = vmatpush1.xpose.msra.mxu0 0.0
        %997 = vmatprep.subr.mxu0 0.0
        %998 = vmatpush1.xpose.msra.mxu0 0.0
        %999 = vmatprep.subr.mxu0 0.0
        %1000 = vmatpush1.xpose.msra.mxu0 0.0
        %1001 = vmatprep.subr.mxu0 0.0
        %1002 = vmatpush1.xpose.msra.mxu0 0.0
        %1003 = vmatprep.subr.mxu0 0.0
        %1004 = vmatpush1.xpose.msra.mxu0 0.0
        %1005 = vmatprep.subr.mxu0 0.0
        %1006 = vmatpush1.xpose.msra.mxu0 0.0
        %1007 = vmatprep.subr.mxu0 0.0
        %1008 = vmatpush1.xpose.msra.mxu0 0.0
        %1009 = vmatprep.subr.mxu0 0.0
        %1010 = vmatpush1.xpose.msra.mxu0 0.0
        %1011 = vmatprep.subr.mxu0 0.0
        %1012 = vmatpush1.xpose.msra.mxu0 0.0
        %1013 = vmatprep.subr.mxu0 0.0
        %1014 = vmatpush1.xpose.msra.mxu0 0.0
        %1015 = vmatprep.subr.mxu0 0.0
        %1016 = vmatpush1.xpose.msra.mxu0 0.0
        %1017 = vmatprep.mubr.f32.mxu0 0.0
        %1018 = vmatmul.mubr.f32.gmra.mrb[0].mxu0 %v948
        %v1019 = vpop.f32.mrb[0].mxu0
        %v1020 = vadd.f32 0.0, %v1019
        %v1021 = vpop.f32.mrb[0].mxu0
        %1022 = vdwg.mxu0
        %v1024 = vsel %vm946, %v773, 0
        %v1027 = vsel %vm946, %v857, 0
        %1029 = vmatprep.subr.mxu0 0.0
        %1030 = vmatpush1.xpose.msra.mxu0 %v1027
        %1031 = vmatprep.subr.mxu0 0.0
        %1032 = vmatpush1.xpose.msra.mxu0 0.0
        %1033 = vmatprep.subr.mxu0 0.0
        %1034 = vmatpush1.xpose.msra.mxu0 0.0
        %1035 = vmatprep.subr.mxu0 0.0
        %1036 = vmatpush1.xpose.msra.mxu0 0.0
        %1037 = vmatprep.subr.mxu0 0.0
        %1038 = vmatpush1.xpose.msra.mxu0 0.0
        %1039 = vmatprep.subr.mxu0 0.0
        %1040 = vmatpush1.xpose.msra.mxu0 0.0
        %1041 = vmatprep.subr.mxu0 0.0
        %1042 = vmatpush1.xpose.msra.mxu0 0.0
        %1043 = vmatprep.subr.mxu0 0.0
        %1044 = vmatpush1.xpose.msra.mxu0 0.0
        %1045 = vmatprep.subr.mxu0 0.0
        %1046 = vmatpush1.xpose.msra.mxu0 0.0
        %1047 = vmatprep.subr.mxu0 0.0
        %1048 = vmatpush1.xpose.msra.mxu0 0.0
        %1049 = vmatprep.subr.mxu0 0.0
        %1050 = vmatpush1.xpose.msra.mxu0 0.0
        %1051 = vmatprep.subr.mxu0 0.0
        %1052 = vmatpush1.xpose.msra.mxu0 0.0
        %1053 = vmatprep.subr.mxu0 0.0
        %1054 = vmatpush1.xpose.msra.mxu0 0.0
        %1055 = vmatprep.subr.mxu0 0.0
        %1056 = vmatpush1.xpose.msra.mxu0 0.0
        %1057 = vmatprep.subr.mxu0 0.0
        %1058 = vmatpush1.xpose.msra.mxu0 0.0
        %1059 = vmatprep.subr.mxu0 0.0
        %1060 = vmatpush1.xpose.msra.mxu0 0.0
        %1061 = vmatprep.subr.mxu0 0.0
        %1062 = vmatpush1.xpose.msra.mxu0 0.0
        %1063 = vmatprep.subr.mxu0 0.0
        %1064 = vmatpush1.xpose.msra.mxu0 0.0
        %1065 = vmatprep.subr.mxu0 0.0
        %1066 = vmatpush1.xpose.msra.mxu0 0.0
        %1067 = vmatprep.subr.mxu0 0.0
        %1068 = vmatpush1.xpose.msra.mxu0 0.0
        %1069 = vmatprep.subr.mxu0 0.0
        %1070 = vmatpush1.xpose.msra.mxu0 0.0
        %1071 = vmatprep.subr.mxu0 0.0
        %1072 = vmatpush1.xpose.msra.mxu0 0.0
        %1073 = vmatprep.subr.mxu0 0.0
        %1074 = vmatpush1.xpose.msra.mxu0 0.0
        %1075 = vmatprep.subr.mxu0 0.0
        %1076 = vmatpush1.xpose.msra.mxu0 0.0
        %1077 = vmatprep.subr.mxu0 0.0
        %1078 = vmatpush1.xpose.msra.mxu0 0.0
        %1079 = vmatprep.subr.mxu0 0.0
        %1080 = vmatpush1.xpose.msra.mxu0 0.0
        %1081 = vmatprep.subr.mxu0 0.0
        %1082 = vmatpush1.xpose.msra.mxu0 0.0
        %1083 = vmatprep.subr.mxu0 0.0
        %1084 = vmatpush1.xpose.msra.mxu0 0.0
        %1085 = vmatprep.subr.mxu0 0.0
        %1086 = vmatpush1.xpose.msra.mxu0 0.0
        %1087 = vmatprep.subr.mxu0 0.0
        %1088 = vmatpush1.xpose.msra.mxu0 0.0
        %1089 = vmatprep.subr.mxu0 0.0
        %1090 = vmatpush1.xpose.msra.mxu0 0.0
        %1091 = vmatprep.subr.mxu0 0.0
        %1092 = vmatpush1.xpose.msra.mxu0 0.0
        %1093 = vmatprep.mubr.f32.mxu0 0.0
        %1094 = vmatmul.mubr.f32.gmra.mrb[0].mxu0 %v1024
        %v1095 = vpop.f32.mrb[0].mxu0
        %v1096 = vadd.f32 0.0, %v1095
        %v1097 = vpop.f32.mrb[0].mxu0
        %1098 = vdwg.mxu0
        %v1099 = vsel %vm946, %v1020, -inf
        %1100 = vmax.xlane.f32.xlu0 %v1099
        %v1101 = vpop.xlane.xlu0 %1100
        %v1102 = vsel %vm946, %v1096, -inf
        %1103 = vmax.xlane.f32.xlu0 %v1102
        %v1104 = vpop.xlane.xlu0 %1103
        %v1105 = vsub.f32 %v1020, %v1101
        %v1106 = vsub.f32 %v1096, %v1104
        %v1107 = vmul.f32 %v1105, 1.442695
        %v1108 = vpow.pop %v1107
        %v1109 = vmul.f32 %v1106, 1.442695
        %v1110 = vpow.pop %v1109
        %v1111 = vsel %vm946, %v1108, 0.0
        %1112 = vadd.xlane.f32.xlu0 %v1111
        %v1113 = vpop.xlane.xlu0 %1112
        %v1114 = vsel %vm946, %v1110, 0.0
        %1115 = vadd.xlane.f32.xlu0 %v1114
        %v1116 = vpop.xlane.xlu0 %1115
        %v1117 = vrcp.pop %v1113
        %v1118 = vrcp.pop %v1116
        %v1119 = vmul.f32 %v1108, %v1117
        %v1120 = vmul.f32 %v1110, %v1118
        %1121 = vst.msk [vmem:[%s660] sm:$0xff] %vm946, %v1119
        %1122 = vst.msk [vmem:[%s660 + $0x8] sm:$0xff] %vm946, %v1120
        %v1124 = vsel %vm946, %v1119, 0
        %1126 = vmatprep.subr.mxu0 0.0
        %1127 = vmatpush1.msra.mxu0 %v938
        %1128 = vmatprep.subr.mxu0 0.0
        %1129 = vmatpush1.msra.mxu0 0.0
        %1130 = vmatprep.subr.mxu0 0.0
        %1131 = vmatpush1.msra.mxu0 0.0
        %1132 = vmatprep.subr.mxu0 0.0
        %1133 = vmatpush1.msra.mxu0 0.0
        %1134 = vmatprep.subr.mxu0 0.0
        %1135 = vmatpush1.msra.mxu0 0.0
        %1136 = vmatprep.subr.mxu0 0.0
        %1137 = vmatpush1.msra.mxu0 0.0
        %1138 = vmatprep.subr.mxu0 0.0
        %1139 = vmatpush1.msra.mxu0 0.0
        %1140 = vmatprep.subr.mxu0 0.0
        %1141 = vmatpush1.msra.mxu0 0.0
        %1142 = vmatprep.subr.mxu0 0.0
        %1143 = vmatpush1.msra.mxu0 0.0
        %1144 = vmatprep.subr.mxu0 0.0
        %1145 = vmatpush1.msra.mxu0 0.0
        %1146 = vmatprep.subr.mxu0 0.0
        %1147 = vmatpush1.msra.mxu0 0.0
        %1148 = vmatprep.subr.mxu0 0.0
        %1149 = vmatpush1.msra.mxu0 0.0
        %1150 = vmatprep.subr.mxu0 0.0
        %1151 = vmatpush1.msra.mxu0 0.0
        %1152 = vmatprep.subr.mxu0 0.0
        %1153 = vmatpush1.msra.mxu0 0.0
        %1154 = vmatprep.subr.mxu0 0.0
        %1155 = vmatpush1.msra.mxu0 0.0
        %1156 = vmatprep.subr.mxu0 0.0
        %1157 = vmatpush1.msra.mxu0 0.0
        %1158 = vmatprep.subr.mxu0 0.0
        %1159 = vmatpush1.msra.mxu0 0.0
        %1160 = vmatprep.subr.mxu0 0.0
        %1161 = vmatpush1.msra.mxu0 0.0
        %1162 = vmatprep.subr.mxu0 0.0
        %1163 = vmatpush1.msra.mxu0 0.0
        %1164 = vmatprep.subr.mxu0 0.0
        %1165 = vmatpush1.msra.mxu0 0.0
        %1166 = vmatprep.subr.mxu0 0.0
        %1167 = vmatpush1.msra.mxu0 0.0
        %1168 = vmatprep.subr.mxu0 0.0
        %1169 = vmatpush1.msra.mxu0 0.0
        %1170 = vmatprep.subr.mxu0 0.0
        %1171 = vmatpush1.msra.mxu0 0.0
        %1172 = vmatprep.subr.mxu0 0.0
        %1173 = vmatpush1.msra.mxu0 0.0
        %1174 = vmatprep.subr.mxu0 0.0
        %1175 = vmatpush1.msra.mxu0 0.0
        %1176 = vmatprep.subr.mxu0 0.0
        %1177 = vmatpush1.msra.mxu0 0.0
        %1178 = vmatprep.subr.mxu0 0.0
        %1179 = vmatpush1.msra.mxu0 0.0
        %1180 = vmatprep.subr.mxu0 0.0
        %1181 = vmatpush1.msra.mxu0 0.0
        %1182 = vmatprep.subr.mxu0 0.0
        %1183 = vmatpush1.msra.mxu0 0.0
        %1184 = vmatprep.subr.mxu0 0.0
        %1185 = vmatpush1.msra.mxu0 0.0
        %1186 = vmatprep.subr.mxu0 0.0
        %1187 = vmatpush1.msra.mxu0 0.0
        %1188 = vmatprep.subr.mxu0 0.0
        %1189 = vmatpush1.msra.mxu0 0.0
        %1190 = vmatprep.mubr.f32.mxu0 0.0
        %1191 = vmatmul.mubr.f32.gmra.mrb[0].mxu0 %v1124
        %v1192 = vpop.f32.mrb[0].mxu0
        %v1193 = vadd.f32 0.0, %v1192
        %v1194 = vpop.f32.mrb[0].mxu0
        %1195 = vdwg.mxu0
        %v1197 = vsel %vm946, %v1120, 0
        %1199 = vmatprep.subr.mxu0 0.0
        %1200 = vmatpush1.msra.mxu0 %v943
        %1201 = vmatprep.subr.mxu0 0.0
        %1202 = vmatpush1.msra.mxu0 0.0
        %1203 = vmatprep.subr.mxu0 0.0
        %1204 = vmatpush1.msra.mxu0 0.0
        %1205 = vmatprep.subr.mxu0 0.0
        %1206 = vmatpush1.msra.mxu0 0.0
        %1207 = vmatprep.subr.mxu0 0.0
        %1208 = vmatpush1.msra.mxu0 0.0
        %1209 = vmatprep.subr.mxu0 0.0
        %1210 = vmatpush1.msra.mxu0 0.0
        %1211 = vmatprep.subr.mxu0 0.0
        %1212 = vmatpush1.msra.mxu0 0.0
        %1213 = vmatprep.subr.mxu0 0.0
        %1214 = vmatpush1.msra.mxu0 0.0
        %1215 = vmatprep.subr.mxu0 0.0
        %1216 = vmatpush1.msra.mxu0 0.0
        %1217 = vmatprep.subr.mxu0 0.0
        %1218 = vmatpush1.msra.mxu0 0.0
        %1219 = vmatprep.subr.mxu0 0.0
        %1220 = vmatpush1.msra.mxu0 0.0
        %1221 = vmatprep.subr.mxu0 0.0
        %1222 = vmatpush1.msra.mxu0 0.0
        %1223 = vmatprep.subr.mxu0 0.0
        %1224 = vmatpush1.msra.mxu0 0.0
        %1225 = vmatprep.subr.mxu0 0.0
        %1226 = vmatpush1.msra.mxu0 0.0
        %1227 = vmatprep.subr.mxu0 0.0
        %1228 = vmatpush1.msra.mxu0 0.0
        %1229 = vmatprep.subr.mxu0 0.0
        %1230 = vmatpush1.msra.mxu0 0.0
        %1231 = vmatprep.subr.mxu0 0.0
        %1232 = vmatpush1.msra.mxu0 0.0
        %1233 = vmatprep.subr.mxu0 0.0
        %1234 = vmatpush1.msra.mxu0 0.0
        %1235 = vmatprep.subr.mxu0 0.0
        %1236 = vmatpush1.msra.mxu0 0.0
        %1237 = vmatprep.subr.mxu0 0.0
        %1238 = vmatpush1.msra.mxu0 0.0
        %1239 = vmatprep.subr.mxu0 0.0
        %1240 = vmatpush1.msra.mxu0 0.0
        %1241 = vmatprep.subr.mxu0 0.0
        %1242 = vmatpush1.msra.mxu0 0.0
        %1243 = vmatprep.subr.mxu0 0.0
        %1244 = vmatpush1.msra.mxu0 0.0
        %1245 = vmatprep.subr.mxu0 0.0
        %1246 = vmatpush1.msra.mxu0 0.0
        %1247 = vmatprep.subr.mxu0 0.0
        %1248 = vmatpush1.msra.mxu0 0.0
        %1249 = vmatprep.subr.mxu0 0.0
        %1250 = vmatpush1.msra.mxu0 0.0
        %1251 = vmatprep.subr.mxu0 0.0
        %1252 = vmatpush1.msra.mxu0 0.0
        %1253 = vmatprep.subr.mxu0 0.0
        %1254 = vmatpush1.msra.mxu0 0.0
        %1255 = vmatprep.subr.mxu0 0.0
        %1256 = vmatpush1.msra.mxu0 0.0
        %1257 = vmatprep.subr.mxu0 0.0
        %1258 = vmatpush1.msra.mxu0 0.0
        %1259 = vmatprep.subr.mxu0 0.0
        %1260 = vmatpush1.msra.mxu0 0.0
        %1261 = vmatprep.subr.mxu0 0.0
        %1262 = vmatpush1.msra.mxu0 0.0
        %1263 = vmatprep.mubr.f32.mxu0 0.0
        %1264 = vmatmul.mubr.f32.gmra.mrb[0].mxu0 %v1197
        %v1265 = vpop.f32.mrb[0].mxu0
        %v1266 = vadd.f32 0.0, %v1265
        %v1267 = vpop.f32.mrb[0].mxu0
        %1268 = vdwg.mxu0
        %1269 = vst.msk [vmem:[#allocation2] sm:$0xff] %vm946, %v1193
        %1270 = vst.msk [vmem:[#allocation2 + $0x8] sm:$0xff] %vm946, %v1266
        %1271 = vrot.lane.b32.xlu0 %v772, 120
        %v1272 = vpop.permute.xlu0 %1271
        %1273 = vrot.lane.b32.xlu0 %v852, 120
        %v1274 = vpop.permute.xlu0 %1273
        %v1275 = vsel %vm946, %v1272, 0
        %v1277 = vsel %vm946, %v1274, 0
        %1279 = vmatprep.subr.mxu0 0.0
        %1280 = vmatpush1.xpose.msra.mxu0 %v1277
        %1281 = vmatprep.subr.mxu0 0.0
        %1282 = vmatpush1.xpose.msra.mxu0 0.0
        %1283 = vmatprep.subr.mxu0 0.0
        %1284 = vmatpush1.xpose.msra.mxu0 0.0
        %1285 = vmatprep.subr.mxu0 0.0
        %1286 = vmatpush1.xpose.msra.mxu0 0.0
        %1287 = vmatprep.subr.mxu0 0.0
        %1288 = vmatpush1.xpose.msra.mxu0 0.0
        %1289 = vmatprep.subr.mxu0 0.0
        %1290 = vmatpush1.xpose.msra.mxu0 0.0
        %1291 = vmatprep.subr.mxu0 0.0
        %1292 = vmatpush1.xpose.msra.mxu0 0.0
        %1293 = vmatprep.subr.mxu0 0.0
        %1294 = vmatpush1.xpose.msra.mxu0 0.0
        %1295 = vmatprep.subr.mxu0 0.0
        %1296 = vmatpush1.xpose.msra.mxu0 0.0
        %1297 = vmatprep.subr.mxu0 0.0
        %1298 = vmatpush1.xpose.msra.mxu0 0.0
        %1299 = vmatprep.subr.mxu0 0.0
        %1300 = vmatpush1.xpose.msra.mxu0 0.0
        %1301 = vmatprep.subr.mxu0 0.0
        %1302 = vmatpush1.xpose.msra.mxu0 0.0
        %1303 = vmatprep.subr.mxu0 0.0
        %1304 = vmatpush1.xpose.msra.mxu0 0.0
        %1305 = vmatprep.subr.mxu0 0.0
        %1306 = vmatpush1.xpose.msra.mxu0 0.0
        %1307 = vmatprep.subr.mxu0 0.0
        %1308 = vmatpush1.xpose.msra.mxu0 0.0
        %1309 = vmatprep.subr.mxu0 0.0
        %1310 = vmatpush1.xpose.msra.mxu0 0.0
        %1311 = vmatprep.subr.mxu0 0.0
        %1312 = vmatpush1.xpose.msra.mxu0 0.0
        %1313 = vmatprep.subr.mxu0 0.0
        %1314 = vmatpush1.xpose.msra.mxu0 0.0
        %1315 = vmatprep.subr.mxu0 0.0
        %1316 = vmatpush1.xpose.msra.mxu0 0.0
        %1317 = vmatprep.subr.mxu0 0.0
        %1318 = vmatpush1.xpose.msra.mxu0 0.0
        %1319 = vmatprep.subr.mxu0 0.0
        %1320 = vmatpush1.xpose.msra.mxu0 0.0
        %1321 = vmatprep.subr.mxu0 0.0
        %1322 = vmatpush1.xpose.msra.mxu0 0.0
        %1323 = vmatprep.subr.mxu0 0.0
        %1324 = vmatpush1.xpose.msra.mxu0 0.0
        %1325 = vmatprep.subr.mxu0 0.0
        %1326 = vmatpush1.xpose.msra.mxu0 0.0
        %1327 = vmatprep.subr.mxu0 0.0
        %1328 = vmatpush1.xpose.msra.mxu0 0.0
        %1329 = vmatprep.subr.mxu0 0.0
        %1330 = vmatpush1.xpose.msra.mxu0 0.0
        %1331 = vmatprep.subr.mxu0 0.0
        %1332 = vmatpush1.xpose.msra.mxu0 0.0
        %1333 = vmatprep.subr.mxu0 0.0
        %1334 = vmatpush1.xpose.msra.mxu0 0.0
        %1335 = vmatprep.subr.mxu0 0.0
        %1336 = vmatpush1.xpose.msra.mxu0 0.0
        %1337 = vmatprep.subr.mxu0 0.0
        %1338 = vmatpush1.xpose.msra.mxu0 0.0
        %1339 = vmatprep.subr.mxu0 0.0
        %1340 = vmatpush1.xpose.msra.mxu0 0.0
        %1341 = vmatprep.subr.mxu0 0.0
        %1342 = vmatpush1.xpose.msra.mxu0 0.0
        %1343 = vmatprep.mubr.f32.mxu0 0.0
        %1344 = vmatmul.mubr.f32.gmra.mrb[0].mxu0 %v1275
        %v1345 = vpop.f32.mrb[0].mxu0
        %v1346 = vadd.f32 0.0, %v1345
        %v1347 = vpop.f32.mrb[0].mxu0
        %1348 = vdwg.mxu0
        %1349 = vrot.lane.b32.xlu0 %v773, 120
        %v1350 = vpop.permute.xlu0 %1349
        %1351 = vrot.lane.b32.xlu0 %v857, 120
        %v1352 = vpop.permute.xlu0 %1351
        %v1353 = vsel %vm946, %v1350, 0
        %v1355 = vsel %vm946, %v1352, 0
        %1357 = vmatprep.subr.mxu0 0.0
        %1358 = vmatpush1.xpose.msra.mxu0 %v1355
        %1359 = vmatprep.subr.mxu0 0.0
        %1360 = vmatpush1.xpose.msra.mxu0 0.0
        %1361 = vmatprep.subr.mxu0 0.0
        %1362 = vmatpush1.xpose.msra.mxu0 0.0
        %1363 = vmatprep.subr.mxu0 0.0
        %1364 = vmatpush1.xpose.msra.mxu0 0.0
        %1365 = vmatprep.subr.mxu0 0.0
        %1366 = vmatpush1.xpose.msra.mxu0 0.0
        %1367 = vmatprep.subr.mxu0 0.0
        %1368 = vmatpush1.xpose.msra.mxu0 0.0
        %1369 = vmatprep.subr.mxu0 0.0
        %1370 = vmatpush1.xpose.msra.mxu0 0.0
        %1371 = vmatprep.subr.mxu0 0.0
        %1372 = vmatpush1.xpose.msra.mxu0 0.0
        %1373 = vmatprep.subr.mxu0 0.0
        %1374 = vmatpush1.xpose.msra.mxu0 0.0
        %1375 = vmatprep.subr.mxu0 0.0
        %1376 = vmatpush1.xpose.msra.mxu0 0.0
        %1377 = vmatprep.subr.mxu0 0.0
        %1378 = vmatpush1.xpose.msra.mxu0 0.0
        %1379 = vmatprep.subr.mxu0 0.0
        %1380 = vmatpush1.xpose.msra.mxu0 0.0
        %1381 = vmatprep.subr.mxu0 0.0
        %1382 = vmatpush1.xpose.msra.mxu0 0.0
        %1383 = vmatprep.subr.mxu0 0.0
        %1384 = vmatpush1.xpose.msra.mxu0 0.0
        %1385 = vmatprep.subr.mxu0 0.0
        %1386 = vmatpush1.xpose.msra.mxu0 0.0
        %1387 = vmatprep.subr.mxu0 0.0
        %1388 = vmatpush1.xpose.msra.mxu0 0.0
        %1389 = vmatprep.subr.mxu0 0.0
        %1390 = vmatpush1.xpose.msra.mxu0 0.0
        %1391 = vmatprep.subr.mxu0 0.0
        %1392 = vmatpush1.xpose.msra.mxu0 0.0
        %1393 = vmatprep.subr.mxu0 0.0
        %1394 = vmatpush1.xpose.msra.mxu0 0.0
        %1395 = vmatprep.subr.mxu0 0.0
        %1396 = vmatpush1.xpose.msra.mxu0 0.0
        %1397 = vmatprep.subr.mxu0 0.0
        %1398 = vmatpush1.xpose.msra.mxu0 0.0
        %1399 = vmatprep.subr.mxu0 0.0
        %1400 = vmatpush1.xpose.msra.mxu0 0.0
        %1401 = vmatprep.subr.mxu0 0.0
        %1402 = vmatpush1.xpose.msra.mxu0 0.0
        %1403 = vmatprep.subr.mxu0 0.0
        %1404 = vmatpush1.xpose.msra.mxu0 0.0
        %1405 = vmatprep.subr.mxu0 0.0
        %1406 = vmatpush1.xpose.msra.mxu0 0.0
        %1407 = vmatprep.subr.mxu0 0.0
        %1408 = vmatpush1.xpose.msra.mxu0 0.0
        %1409 = vmatprep.subr.mxu0 0.0
        %1410 = vmatpush1.xpose.msra.mxu0 0.0
        %1411 = vmatprep.subr.mxu0 0.0
        %1412 = vmatpush1.xpose.msra.mxu0 0.0
        %1413 = vmatprep.subr.mxu0 0.0
        %1414 = vmatpush1.xpose.msra.mxu0 0.0
        %1415 = vmatprep.subr.mxu0 0.0
        %1416 = vmatpush1.xpose.msra.mxu0 0.0
        %1417 = vmatprep.subr.mxu0 0.0
        %1418 = vmatpush1.xpose.msra.mxu0 0.0
        %1419 = vmatprep.subr.mxu0 0.0
        %1420 = vmatpush1.xpose.msra.mxu0 0.0
        %1421 = vmatprep.mubr.f32.mxu0 0.0
        %1422 = vmatmul.mubr.f32.gmra.mrb[0].mxu0 %v1353
        %v1423 = vpop.f32.mrb[0].mxu0
        %v1424 = vadd.f32 0.0, %v1423
        %v1425 = vpop.f32.mrb[0].mxu0
        %1426 = vdwg.mxu0
        %v1427 = vsel %vm946, %v1346, -inf
        %1428 = vmax.xlane.f32.xlu0 %v1427
        %v1429 = vpop.xlane.xlu0 %1428
        %v1430 = vsel %vm946, %v1424, -inf
        %1431 = vmax.xlane.f32.xlu0 %v1430
        %v1432 = vpop.xlane.xlu0 %1431
        %v1433 = vsub.f32 %v1346, %v1429
        %v1434 = vsub.f32 %v1424, %v1432
        %v1435 = vmul.f32 %v1433, 1.442695
        %v1436 = vpow.pop %v1435
        %v1437 = vmul.f32 %v1434, 1.442695
        %v1438 = vpow.pop %v1437
        %v1439 = vsel %vm946, %v1436, 0.0
        %1440 = vadd.xlane.f32.xlu0 %v1439
        %v1441 = vpop.xlane.xlu0 %1440
        %v1442 = vsel %vm946, %v1438, 0.0
        %1443 = vadd.xlane.f32.xlu0 %v1442
        %v1444 = vpop.xlane.xlu0 %1443
        %v1445 = vrcp.pop %v1441
        %v1446 = vrcp.pop %v1444
        %v1447 = vmul.f32 %v1436, %v1445
        %v1448 = vmul.f32 %v1438, %v1446
        %s1449 = scalar_lea.vmem %s660, 16 [#allocation13]
        %1450 = vst.msk [vmem:[%s1449] sm:$0xff] %vm946, %v1447
        %1451 = vst.msk [vmem:[%s1449 + $0x8] sm:$0xff] %vm946, %v1448
        %1453 = vrot.lane.b32.xlu0 %v938, 120
        %v1454 = vpop.permute.xlu0 %1453
        %v1457 = vsel %vm946, %v1447, 0
        %1459 = vmatprep.subr.mxu0 0.0
        %1460 = vmatpush1.msra.mxu0 %v1454
        %1461 = vmatprep.subr.mxu0 0.0
        %1462 = vmatpush1.msra.mxu0 0.0
        %1463 = vmatprep.subr.mxu0 0.0
        %1464 = vmatpush1.msra.mxu0 0.0
        %1465 = vmatprep.subr.mxu0 0.0
        %1466 = vmatpush1.msra.mxu0 0.0
        %1467 = vmatprep.subr.mxu0 0.0
        %1468 = vmatpush1.msra.mxu0 0.0
        %1469 = vmatprep.subr.mxu0 0.0
        %1470 = vmatpush1.msra.mxu0 0.0
        %1471 = vmatprep.subr.mxu0 0.0
        %1472 = vmatpush1.msra.mxu0 0.0
        %1473 = vmatprep.subr.mxu0 0.0
        %1474 = vmatpush1.msra.mxu0 0.0
        %1475 = vmatprep.subr.mxu0 0.0
        %1476 = vmatpush1.msra.mxu0 0.0
        %1477 = vmatprep.subr.mxu0 0.0
        %1478 = vmatpush1.msra.mxu0 0.0
        %1479 = vmatprep.subr.mxu0 0.0
        %1480 = vmatpush1.msra.mxu0 0.0
        %1481 = vmatprep.subr.mxu0 0.0
        %1482 = vmatpush1.msra.mxu0 0.0
        %1483 = vmatprep.subr.mxu0 0.0
        %1484 = vmatpush1.msra.mxu0 0.0
        %1485 = vmatprep.subr.mxu0 0.0
        %1486 = vmatpush1.msra.mxu0 0.0
        %1487 = vmatprep.subr.mxu0 0.0
        %1488 = vmatpush1.msra.mxu0 0.0
        %1489 = vmatprep.subr.mxu0 0.0
        %1490 = vmatpush1.msra.mxu0 0.0
        %1491 = vmatprep.subr.mxu0 0.0
        %1492 = vmatpush1.msra.mxu0 0.0
        %1493 = vmatprep.subr.mxu0 0.0
        %1494 = vmatpush1.msra.mxu0 0.0
        %1495 = vmatprep.subr.mxu0 0.0
        %1496 = vmatpush1.msra.mxu0 0.0
        %1497 = vmatprep.subr.mxu0 0.0
        %1498 = vmatpush1.msra.mxu0 0.0
        %1499 = vmatprep.subr.mxu0 0.0
        %1500 = vmatpush1.msra.mxu0 0.0
        %1501 = vmatprep.subr.mxu0 0.0
        %1502 = vmatpush1.msra.mxu0 0.0
        %1503 = vmatprep.subr.mxu0 0.0
        %1504 = vmatpush1.msra.mxu0 0.0
        %1505 = vmatprep.subr.mxu0 0.0
        %1506 = vmatpush1.msra.mxu0 0.0
        %1507 = vmatprep.subr.mxu0 0.0
        %1508 = vmatpush1.msra.mxu0 0.0
        %1509 = vmatprep.subr.mxu0 0.0
        %1510 = vmatpush1.msra.mxu0 0.0
        %1511 = vmatprep.subr.mxu0 0.0
        %1512 = vmatpush1.msra.mxu0 0.0
        %1513 = vmatprep.subr.mxu0 0.0
        %1514 = vmatpush1.msra.mxu0 0.0
        %1515 = vmatprep.subr.mxu0 0.0
        %1516 = vmatpush1.msra.mxu0 0.0
        %1517 = vmatprep.subr.mxu0 0.0
        %1518 = vmatpush1.msra.mxu0 0.0
        %1519 = vmatprep.subr.mxu0 0.0
        %1520 = vmatpush1.msra.mxu0 0.0
        %1521 = vmatprep.subr.mxu0 0.0
        %1522 = vmatpush1.msra.mxu0 0.0
        %1523 = vmatprep.mubr.f32.mxu0 0.0
        %1524 = vmatmul.mubr.f32.gmra.mrb[0].mxu0 %v1457
        %v1525 = vpop.f32.mrb[0].mxu0
        %v1526 = vadd.f32 0.0, %v1525
        %v1527 = vpop.f32.mrb[0].mxu0
        %1528 = vdwg.mxu0
        %1530 = vrot.lane.b32.xlu0 %v943, 120
        %v1531 = vpop.permute.xlu0 %1530
        %v1534 = vsel %vm946, %v1448, 0
        %1536 = vmatprep.subr.mxu0 0.0
        %1537 = vmatpush1.msra.mxu0 %v1531
        %1538 = vmatprep.subr.mxu0 0.0
        %1539 = vmatpush1.msra.mxu0 0.0
        %1540 = vmatprep.subr.mxu0 0.0
        %1541 = vmatpush1.msra.mxu0 0.0
        %1542 = vmatprep.subr.mxu0 0.0
        %1543 = vmatpush1.msra.mxu0 0.0
        %1544 = vmatprep.subr.mxu0 0.0
        %1545 = vmatpush1.msra.mxu0 0.0
        %1546 = vmatprep.subr.mxu0 0.0
        %1547 = vmatpush1.msra.mxu0 0.0
        %1548 = vmatprep.subr.mxu0 0.0
        %1549 = vmatpush1.msra.mxu0 0.0
        %1550 = vmatprep.subr.mxu0 0.0
        %1551 = vmatpush1.msra.mxu0 0.0
        %1552 = vmatprep.subr.mxu0 0.0
        %1553 = vmatpush1.msra.mxu0 0.0
        %1554 = vmatprep.subr.mxu0 0.0
        %1555 = vmatpush1.msra.mxu0 0.0
        %1556 = vmatprep.subr.mxu0 0.0
        %1557 = vmatpush1.msra.mxu0 0.0
        %1558 = vmatprep.subr.mxu0 0.0
        %1559 = vmatpush1.msra.mxu0 0.0
        %1560 = vmatprep.subr.mxu0 0.0
        %1561 = vmatpush1.msra.mxu0 0.0
        %1562 = vmatprep.subr.mxu0 0.0
        %1563 = vmatpush1.msra.mxu0 0.0
        %1564 = vmatprep.subr.mxu0 0.0
        %1565 = vmatpush1.msra.mxu0 0.0
        %1566 = vmatprep.subr.mxu0 0.0
        %1567 = vmatpush1.msra.mxu0 0.0
        %1568 = vmatprep.subr.mxu0 0.0
        %1569 = vmatpush1.msra.mxu0 0.0
        %1570 = vmatprep.subr.mxu0 0.0
        %1571 = vmatpush1.msra.mxu0 0.0
        %1572 = vmatprep.subr.mxu0 0.0
        %1573 = vmatpush1.msra.mxu0 0.0
        %1574 = vmatprep.subr.mxu0 0.0
        %1575 = vmatpush1.msra.mxu0 0.0
        %1576 = vmatprep.subr.mxu0 0.0
        %1577 = vmatpush1.msra.mxu0 0.0
        %1578 = vmatprep.subr.mxu0 0.0
        %1579 = vmatpush1.msra.mxu0 0.0
        %1580 = vmatprep.subr.mxu0 0.0
        %1581 = vmatpush1.msra.mxu0 0.0
        %1582 = vmatprep.subr.mxu0 0.0
        %1583 = vmatpush1.msra.mxu0 0.0
        %1584 = vmatprep.subr.mxu0 0.0
        %1585 = vmatpush1.msra.mxu0 0.0
        %1586 = vmatprep.subr.mxu0 0.0
        %1587 = vmatpush1.msra.mxu0 0.0
        %1588 = vmatprep.subr.mxu0 0.0
        %1589 = vmatpush1.msra.mxu0 0.0
        %1590 = vmatprep.subr.mxu0 0.0
        %1591 = vmatpush1.msra.mxu0 0.0
        %1592 = vmatprep.subr.mxu0 0.0
        %1593 = vmatpush1.msra.mxu0 0.0
        %1594 = vmatprep.subr.mxu0 0.0
        %1595 = vmatpush1.msra.mxu0 0.0
        %1596 = vmatprep.subr.mxu0 0.0
        %1597 = vmatpush1.msra.mxu0 0.0
        %1598 = vmatprep.subr.mxu0 0.0
        %1599 = vmatpush1.msra.mxu0 0.0
        %1600 = vmatprep.mubr.f32.mxu0 0.0
        %1601 = vmatmul.mubr.f32.gmra.mrb[0].mxu0 %v1534
        %v1602 = vpop.f32.mrb[0].mxu0
        %v1603 = vadd.f32 0.0, %v1602
        %v1604 = vpop.f32.mrb[0].mxu0
        %1605 = vdwg.mxu0
        %1608 = vrot.lane.b32.xlu0 %v1526, 8
        %v1609 = vpop.permute.xlu0 %1608
        %1610 = vrot.lane.b32.xlu0 %v1603, 8
        %v1611 = vpop.permute.xlu0 %1610
        %vm1614 = vcmask 130112
        %1615 = vst.msk [vmem:[#allocation2] sm:$0xff] %vm1614, %v1609
        %1616 = vst.msk [vmem:[#allocation2 + $0x8] sm:$0xff] %vm1614, %v1611
        %1617 = vrot.lane.b32.xlu0 %v772, 112
        %v1618 = vpop.permute.xlu0 %1617
        %1619 = vrot.lane.b32.xlu0 %v852, 112
        %v1620 = vpop.permute.xlu0 %1619
        %v1621 = vsel %vm946, %v1618, 0
        %v1623 = vsel %vm946, %v1620, 0
        %1625 = vmatprep.subr.mxu0 0.0
        %1626 = vmatpush1.xpose.msra.mxu0 %v1623
        %1627 = vmatprep.subr.mxu0 0.0
        %1628 = vmatpush1.xpose.msra.mxu0 0.0
        %1629 = vmatprep.subr.mxu0 0.0
        %1630 = vmatpush1.xpose.msra.mxu0 0.0
        %1631 = vmatprep.subr.mxu0 0.0
        %1632 = vmatpush1.xpose.msra.mxu0 0.0
        %1633 = vmatprep.subr.mxu0 0.0
        %1634 = vmatpush1.xpose.msra.mxu0 0.0
        %1635 = vmatprep.subr.mxu0 0.0
        %1636 = vmatpush1.xpose.msra.mxu0 0.0
        %1637 = vmatprep.subr.mxu0 0.0
        %1638 = vmatpush1.xpose.msra.mxu0 0.0
        %1639 = vmatprep.subr.mxu0 0.0
        %1640 = vmatpush1.xpose.msra.mxu0 0.0
        %1641 = vmatprep.subr.mxu0 0.0
        %1642 = vmatpush1.xpose.msra.mxu0 0.0
        %1643 = vmatprep.subr.mxu0 0.0
        %1644 = vmatpush1.xpose.msra.mxu0 0.0
        %1645 = vmatprep.subr.mxu0 0.0
        %1646 = vmatpush1.xpose.msra.mxu0 0.0
        %1647 = vmatprep.subr.mxu0 0.0
        %1648 = vmatpush1.xpose.msra.mxu0 0.0
        %1649 = vmatprep.subr.mxu0 0.0
        %1650 = vmatpush1.xpose.msra.mxu0 0.0
        %1651 = vmatprep.subr.mxu0 0.0
        %1652 = vmatpush1.xpose.msra.mxu0 0.0
        %1653 = vmatprep.subr.mxu0 0.0
        %1654 = vmatpush1.xpose.msra.mxu0 0.0
        %1655 = vmatprep.subr.mxu0 0.0
        %1656 = vmatpush1.xpose.msra.mxu0 0.0
        %1657 = vmatprep.subr.mxu0 0.0
        %1658 = vmatpush1.xpose.msra.mxu0 0.0
        %1659 = vmatprep.subr.mxu0 0.0
        %1660 = vmatpush1.xpose.msra.mxu0 0.0
        %1661 = vmatprep.subr.mxu0 0.0
        %1662 = vmatpush1.xpose.msra.mxu0 0.0
        %1663 = vmatprep.subr.mxu0 0.0
        %1664 = vmatpush1.xpose.msra.mxu0 0.0
        %1665 = vmatprep.subr.mxu0 0.0
        %1666 = vmatpush1.xpose.msra.mxu0 0.0
        %1667 = vmatprep.subr.mxu0 0.0
        %1668 = vmatpush1.xpose.msra.mxu0 0.0
        %1669 = vmatprep.subr.mxu0 0.0
        %1670 = vmatpush1.xpose.msra.mxu0 0.0
        %1671 = vmatprep.subr.mxu0 0.0
        %1672 = vmatpush1.xpose.msra.mxu0 0.0
        %1673 = vmatprep.subr.mxu0 0.0
        %1674 = vmatpush1.xpose.msra.mxu0 0.0
        %1675 = vmatprep.subr.mxu0 0.0
        %1676 = vmatpush1.xpose.msra.mxu0 0.0
        %1677 = vmatprep.subr.mxu0 0.0
        %1678 = vmatpush1.xpose.msra.mxu0 0.0
        %1679 = vmatprep.subr.mxu0 0.0
        %1680 = vmatpush1.xpose.msra.mxu0 0.0
        %1681 = vmatprep.subr.mxu0 0.0
        %1682 = vmatpush1.xpose.msra.mxu0 0.0
        %1683 = vmatprep.subr.mxu0 0.0
        %1684 = vmatpush1.xpose.msra.mxu0 0.0
        %1685 = vmatprep.subr.mxu0 0.0
        %1686 = vmatpush1.xpose.msra.mxu0 0.0
        %1687 = vmatprep.subr.mxu0 0.0
        %1688 = vmatpush1.xpose.msra.mxu0 0.0
        %1689 = vmatprep.mubr.f32.mxu0 0.0
        %1690 = vmatmul.mubr.f32.gmra.mrb[0].mxu0 %v1621
        %v1691 = vpop.f32.mrb[0].mxu0
        %v1692 = vadd.f32 0.0, %v1691
        %v1693 = vpop.f32.mrb[0].mxu0
        %1694 = vdwg.mxu0
        %1695 = vrot.lane.b32.xlu0 %v773, 112
        %v1696 = vpop.permute.xlu0 %1695
        %1697 = vrot.lane.b32.xlu0 %v857, 112
        %v1698 = vpop.permute.xlu0 %1697
        %v1699 = vsel %vm946, %v1696, 0
        %v1701 = vsel %vm946, %v1698, 0
        %1703 = vmatprep.subr.mxu0 0.0
        %1704 = vmatpush1.xpose.msra.mxu0 %v1701
        %1705 = vmatprep.subr.mxu0 0.0
        %1706 = vmatpush1.xpose.msra.mxu0 0.0
        %1707 = vmatprep.subr.mxu0 0.0
        %1708 = vmatpush1.xpose.msra.mxu0 0.0
        %1709 = vmatprep.subr.mxu0 0.0
        %1710 = vmatpush1.xpose.msra.mxu0 0.0
        %1711 = vmatprep.subr.mxu0 0.0
        %1712 = vmatpush1.xpose.msra.mxu0 0.0
        %1713 = vmatprep.subr.mxu0 0.0
        %1714 = vmatpush1.xpose.msra.mxu0 0.0
        %1715 = vmatprep.subr.mxu0 0.0
        %1716 = vmatpush1.xpose.msra.mxu0 0.0
        %1717 = vmatprep.subr.mxu0 0.0
        %1718 = vmatpush1.xpose.msra.mxu0 0.0
        %1719 = vmatprep.subr.mxu0 0.0
        %1720 = vmatpush1.xpose.msra.mxu0 0.0
        %1721 = vmatprep.subr.mxu0 0.0
        %1722 = vmatpush1.xpose.msra.mxu0 0.0
        %1723 = vmatprep.subr.mxu0 0.0
        %1724 = vmatpush1.xpose.msra.mxu0 0.0
        %1725 = vmatprep.subr.mxu0 0.0
        %1726 = vmatpush1.xpose.msra.mxu0 0.0
        %1727 = vmatprep.subr.mxu0 0.0
        %1728 = vmatpush1.xpose.msra.mxu0 0.0
        %1729 = vmatprep.subr.mxu0 0.0
        %1730 = vmatpush1.xpose.msra.mxu0 0.0
        %1731 = vmatprep.subr.mxu0 0.0
        %1732 = vmatpush1.xpose.msra.mxu0 0.0
        %1733 = vmatprep.subr.mxu0 0.0
        %1734 = vmatpush1.xpose.msra.mxu0 0.0
        %1735 = vmatprep.subr.mxu0 0.0
        %1736 = vmatpush1.xpose.msra.mxu0 0.0
        %1737 = vmatprep.subr.mxu0 0.0
        %1738 = vmatpush1.xpose.msra.mxu0 0.0
        %1739 = vmatprep.subr.mxu0 0.0
        %1740 = vmatpush1.xpose.msra.mxu0 0.0
        %1741 = vmatprep.subr.mxu0 0.0
        %1742 = vmatpush1.xpose.msra.mxu0 0.0
        %1743 = vmatprep.subr.mxu0 0.0
        %1744 = vmatpush1.xpose.msra.mxu0 0.0
        %1745 = vmatprep.subr.mxu0 0.0
        %1746 = vmatpush1.xpose.msra.mxu0 0.0
        %1747 = vmatprep.subr.mxu0 0.0
        %1748 = vmatpush1.xpose.msra.mxu0 0.0
        %1749 = vmatprep.subr.mxu0 0.0
        %1750 = vmatpush1.xpose.msra.mxu0 0.0
        %1751 = vmatprep.subr.mxu0 0.0
        %1752 = vmatpush1.xpose.msra.mxu0 0.0
        %1753 = vmatprep.subr.mxu0 0.0
        %1754 = vmatpush1.xpose.msra.mxu0 0.0
        %1755 = vmatprep.subr.mxu0 0.0
        %1756 = vmatpush1.xpose.msra.mxu0 0.0
        %1757 = vmatprep.subr.mxu0 0.0
        %1758 = vmatpush1.xpose.msra.mxu0 0.0
        %1759 = vmatprep.subr.mxu0 0.0
        %1760 = vmatpush1.xpose.msra.mxu0 0.0
        %1761 = vmatprep.subr.mxu0 0.0
        %1762 = vmatpush1.xpose.msra.mxu0 0.0
        %1763 = vmatprep.subr.mxu0 0.0
        %1764 = vmatpush1.xpose.msra.mxu0 0.0
        %1765 = vmatprep.subr.mxu0 0.0
        %1766 = vmatpush1.xpose.msra.mxu0 0.0
        %1767 = vmatprep.mubr.f32.mxu0 0.0
        %1768 = vmatmul.mubr.f32.gmra.mrb[0].mxu0 %v1699
        %v1769 = vpop.f32.mrb[0].mxu0
        %v1770 = vadd.f32 0.0, %v1769
        %v1771 = vpop.f32.mrb[0].mxu0
        %1772 = vdwg.mxu0
        %v1773 = vsel %vm946, %v1692, -inf
        %1774 = vmax.xlane.f32.xlu0 %v1773
        %v1775 = vpop.xlane.xlu0 %1774
        %v1776 = vsel %vm946, %v1770, -inf
        %1777 = vmax.xlane.f32.xlu0 %v1776
        %v1778 = vpop.xlane.xlu0 %1777
        %v1779 = vsub.f32 %v1692, %v1775
        %v1780 = vsub.f32 %v1770, %v1778
        %v1781 = vmul.f32 %v1779, 1.442695
        %v1782 = vpow.pop %v1781
        %v1783 = vmul.f32 %v1780, 1.442695
        %v1784 = vpow.pop %v1783
        %v1785 = vsel %vm946, %v1782, 0.0
        %1786 = vadd.xlane.f32.xlu0 %v1785
        %v1787 = vpop.xlane.xlu0 %1786
        %v1788 = vsel %vm946, %v1784, 0.0
        %1789 = vadd.xlane.f32.xlu0 %v1788
        %v1790 = vpop.xlane.xlu0 %1789
        %v1791 = vrcp.pop %v1787
        %v1792 = vrcp.pop %v1790
        %v1793 = vmul.f32 %v1782, %v1791
        %v1794 = vmul.f32 %v1784, %v1792
        %s1795 = scalar_lea.vmem %s660, 32 [#allocation13]
        %1796 = vst.msk [vmem:[%s1795] sm:$0xff] %vm946, %v1793
        %1797 = vst.msk [vmem:[%s1795 + $0x8] sm:$0xff] %vm946, %v1794
        %1798 = vrot.lane.b32.xlu0 %v938, 112
        %v1799 = vpop.permute.xlu0 %1798
        %v1802 = vsel %vm946, %v1793, 0
        %1804 = vmatprep.subr.mxu0 0.0
        %1805 = vmatpush1.msra.mxu0 %v1799
        %1806 = vmatprep.subr.mxu0 0.0
        %1807 = vmatpush1.msra.mxu0 0.0
        %1808 = vmatprep.subr.mxu0 0.0
        %1809 = vmatpush1.msra.mxu0 0.0
        %1810 = vmatprep.subr.mxu0 0.0
        %1811 = vmatpush1.msra.mxu0 0.0
        %1812 = vmatprep.subr.mxu0 0.0
        %1813 = vmatpush1.msra.mxu0 0.0
        %1814 = vmatprep.subr.mxu0 0.0
        %1815 = vmatpush1.msra.mxu0 0.0
        %1816 = vmatprep.subr.mxu0 0.0
        %1817 = vmatpush1.msra.mxu0 0.0
        %1818 = vmatprep.subr.mxu0 0.0
        %1819 = vmatpush1.msra.mxu0 0.0
        %1820 = vmatprep.subr.mxu0 0.0
        %1821 = vmatpush1.msra.mxu0 0.0
        %1822 = vmatprep.subr.mxu0 0.0
        %1823 = vmatpush1.msra.mxu0 0.0
        %1824 = vmatprep.subr.mxu0 0.0
        %1825 = vmatpush1.msra.mxu0 0.0
        %1826 = vmatprep.subr.mxu0 0.0
        %1827 = vmatpush1.msra.mxu0 0.0
        %1828 = vmatprep.subr.mxu0 0.0
        %1829 = vmatpush1.msra.mxu0 0.0
        %1830 = vmatprep.subr.mxu0 0.0
        %1831 = vmatpush1.msra.mxu0 0.0
        %1832 = vmatprep.subr.mxu0 0.0
        %1833 = vmatpush1.msra.mxu0 0.0
        %1834 = vmatprep.subr.mxu0 0.0
        %1835 = vmatpush1.msra.mxu0 0.0
        %1836 = vmatprep.subr.mxu0 0.0
        %1837 = vmatpush1.msra.mxu0 0.0
        %1838 = vmatprep.subr.mxu0 0.0
        %1839 = vmatpush1.msra.mxu0 0.0
        %1840 = vmatprep.subr.mxu0 0.0
        %1841 = vmatpush1.msra.mxu0 0.0
        %1842 = vmatprep.subr.mxu0 0.0
        %1843 = vmatpush1.msra.mxu0 0.0
        %1844 = vmatprep.subr.mxu0 0.0
        %1845 = vmatpush1.msra.mxu0 0.0
        %1846 = vmatprep.subr.mxu0 0.0
        %1847 = vmatpush1.msra.mxu0 0.0
        %1848 = vmatprep.subr.mxu0 0.0
        %1849 = vmatpush1.msra.mxu0 0.0
        %1850 = vmatprep.subr.mxu0 0.0
        %1851 = vmatpush1.msra.mxu0 0.0
        %1852 = vmatprep.subr.mxu0 0.0
        %1853 = vmatpush1.msra.mxu0 0.0
        %1854 = vmatprep.subr.mxu0 0.0
        %1855 = vmatpush1.msra.mxu0 0.0
        %1856 = vmatprep.subr.mxu0 0.0
        %1857 = vmatpush1.msra.mxu0 0.0
        %1858 = vmatprep.subr.mxu0 0.0
        %1859 = vmatpush1.msra.mxu0 0.0
        %1860 = vmatprep.subr.mxu0 0.0
        %1861 = vmatpush1.msra.mxu0 0.0
        %1862 = vmatprep.subr.mxu0 0.0
        %1863 = vmatpush1.msra.mxu0 0.0
        %1864 = vmatprep.subr.mxu0 0.0
        %1865 = vmatpush1.msra.mxu0 0.0
        %1866 = vmatprep.subr.mxu0 0.0
        %1867 = vmatpush1.msra.mxu0 0.0
        %1868 = vmatprep.mubr.f32.mxu0 0.0
        %1869 = vmatmul.mubr.f32.gmra.mrb[0].mxu0 %v1802
        %v1870 = vpop.f32.mrb[0].mxu0
        %v1871 = vadd.f32 0.0, %v1870
        %v1872 = vpop.f32.mrb[0].mxu0
        %1873 = vdwg.mxu0
        %1874 = vrot.lane.b32.xlu0 %v943, 112
        %v1875 = vpop.permute.xlu0 %1874
        %v1878 = vsel %vm946, %v1794, 0
        %1880 = vmatprep.subr.mxu0 0.0
        %1881 = vmatpush1.msra.mxu0 %v1875
        %1882 = vmatprep.subr.mxu0 0.0
        %1883 = vmatpush1.msra.mxu0 0.0
        %1884 = vmatprep.subr.mxu0 0.0
        %1885 = vmatpush1.msra.mxu0 0.0
        %1886 = vmatprep.subr.mxu0 0.0
        %1887 = vmatpush1.msra.mxu0 0.0
        %1888 = vmatprep.subr.mxu0 0.0
        %1889 = vmatpush1.msra.mxu0 0.0
        %1890 = vmatprep.subr.mxu0 0.0
        %1891 = vmatpush1.msra.mxu0 0.0
        %1892 = vmatprep.subr.mxu0 0.0
        %1893 = vmatpush1.msra.mxu0 0.0
        %1894 = vmatprep.subr.mxu0 0.0
        %1895 = vmatpush1.msra.mxu0 0.0
        %1896 = vmatprep.subr.mxu0 0.0
        %1897 = vmatpush1.msra.mxu0 0.0
        %1898 = vmatprep.subr.mxu0 0.0
        %1899 = vmatpush1.msra.mxu0 0.0
        %1900 = vmatprep.subr.mxu0 0.0
        %1901 = vmatpush1.msra.mxu0 0.0
        %1902 = vmatprep.subr.mxu0 0.0
        %1903 = vmatpush1.msra.mxu0 0.0
        %1904 = vmatprep.subr.mxu0 0.0
        %1905 = vmatpush1.msra.mxu0 0.0
        %1906 = vmatprep.subr.mxu0 0.0
        %1907 = vmatpush1.msra.mxu0 0.0
        %1908 = vmatprep.subr.mxu0 0.0
        %1909 = vmatpush1.msra.mxu0 0.0
        %1910 = vmatprep.subr.mxu0 0.0
        %1911 = vmatpush1.msra.mxu0 0.0
        %1912 = vmatprep.subr.mxu0 0.0
        %1913 = vmatpush1.msra.mxu0 0.0
        %1914 = vmatprep.subr.mxu0 0.0
        %1915 = vmatpush1.msra.mxu0 0.0
        %1916 = vmatprep.subr.mxu0 0.0
        %1917 = vmatpush1.msra.mxu0 0.0
        %1918 = vmatprep.subr.mxu0 0.0
        %1919 = vmatpush1.msra.mxu0 0.0
        %1920 = vmatprep.subr.mxu0 0.0
        %1921 = vmatpush1.msra.mxu0 0.0
        %1922 = vmatprep.subr.mxu0 0.0
        %1923 = vmatpush1.msra.mxu0 0.0
        %1924 = vmatprep.subr.mxu0 0.0
        %1925 = vmatpush1.msra.mxu0 0.0
        %1926 = vmatprep.subr.mxu0 0.0
        %1927 = vmatpush1.msra.mxu0 0.0
        %1928 = vmatprep.subr.mxu0 0.0
        %1929 = vmatpush1.msra.mxu0 0.0
        %1930 = vmatprep.subr.mxu0 0.0
        %1931 = vmatpush1.msra.mxu0 0.0
        %1932 = vmatprep.subr.mxu0 0.0
        %1933 = vmatpush1.msra.mxu0 0.0
        %1934 = vmatprep.subr.mxu0 0.0
        %1935 = vmatpush1.msra.mxu0 0.0
        %1936 = vmatprep.subr.mxu0 0.0
        %1937 = vmatpush1.msra.mxu0 0.0
        %1938 = vmatprep.subr.mxu0 0.0
        %1939 = vmatpush1.msra.mxu0 0.0
        %1940 = vmatprep.subr.mxu0 0.0
        %1941 = vmatpush1.msra.mxu0 0.0
        %1942 = vmatprep.subr.mxu0 0.0
        %1943 = vmatpush1.msra.mxu0 0.0
        %1944 = vmatprep.mubr.f32.mxu0 0.0
        %1945 = vmatmul.mubr.f32.gmra.mrb[0].mxu0 %v1878
        %v1946 = vpop.f32.mrb[0].mxu0
        %v1947 = vadd.f32 0.0, %v1946
        %v1948 = vpop.f32.mrb[0].mxu0
        %1949 = vdwg.mxu0
        %1952 = vrot.lane.b32.xlu0 %v1871, 16
        %v1953 = vpop.permute.xlu0 %1952
        %1954 = vrot.lane.b32.xlu0 %v1947, 16
        %v1955 = vpop.permute.xlu0 %1954
        %vm1958 = vcmask 195712
        %1959 = vst.msk [vmem:[#allocation2] sm:$0xff] %vm1958, %v1953
        %1960 = vst.msk [vmem:[#allocation2 + $0x8] sm:$0xff] %vm1958, %v1955
        %1961 = vrot.lane.b32.xlu0 %v772, 104
        %v1962 = vpop.permute.xlu0 %1961
        %1963 = vrot.lane.b32.xlu0 %v852, 104
        %v1964 = vpop.permute.xlu0 %1963
        %v1965 = vsel %vm946, %v1962, 0
        %v1967 = vsel %vm946, %v1964, 0
        %1969 = vmatprep.subr.mxu0 0.0
        %1970 = vmatpush1.xpose.msra.mxu0 %v1967
        %1971 = vmatprep.subr.mxu0 0.0
        %1972 = vmatpush1.xpose.msra.mxu0 0.0
        %1973 = vmatprep.subr.mxu0 0.0
        %1974 = vmatpush1.xpose.msra.mxu0 0.0
        %1975 = vmatprep.subr.mxu0 0.0
        %1976 = vmatpush1.xpose.msra.mxu0 0.0
        %1977 = vmatprep.subr.mxu0 0.0
        %1978 = vmatpush1.xpose.msra.mxu0 0.0
        %1979 = vmatprep.subr.mxu0 0.0
        %1980 = vmatpush1.xpose.msra.mxu0 0.0
        %1981 = vmatprep.subr.mxu0 0.0
        %1982 = vmatpush1.xpose.msra.mxu0 0.0
        %1983 = vmatprep.subr.mxu0 0.0
        %1984 = vmatpush1.xpose.msra.mxu0 0.0
        %1985 = vmatprep.subr.mxu0 0.0
        %1986 = vmatpush1.xpose.msra.mxu0 0.0
        %1987 = vmatprep.subr.mxu0 0.0
        %1988 = vmatpush1.xpose.msra.mxu0 0.0
        %1989 = vmatprep.subr.mxu0 0.0
        %1990 = vmatpush1.xpose.msra.mxu0 0.0
        %1991 = vmatprep.subr.mxu0 0.0
        %1992 = vmatpush1.xpose.msra.mxu0 0.0
        %1993 = vmatprep.subr.mxu0 0.0
        %1994 = vmatpush1.xpose.msra.mxu0 0.0
        %1995 = vmatprep.subr.mxu0 0.0
        %1996 = vmatpush1.xpose.msra.mxu0 0.0
        %1997 = vmatprep.subr.mxu0 0.0
        %1998 = vmatpush1.xpose.msra.mxu0 0.0
        %1999 = vmatprep.subr.mxu0 0.0
        %2000 = vmatpush1.xpose.msra.mxu0 0.0
        %2001 = vmatprep.subr.mxu0 0.0
        %2002 = vmatpush1.xpose.msra.mxu0 0.0
        %2003 = vmatprep.subr.mxu0 0.0
        %2004 = vmatpush1.xpose.msra.mxu0 0.0
        %2005 = vmatprep.subr.mxu0 0.0
        %2006 = vmatpush1.xpose.msra.mxu0 0.0
        %2007 = vmatprep.subr.mxu0 0.0
        %2008 = vmatpush1.xpose.msra.mxu0 0.0
        %2009 = vmatprep.subr.mxu0 0.0
        %2010 = vmatpush1.xpose.msra.mxu0 0.0
        %2011 = vmatprep.subr.mxu0 0.0
        %2012 = vmatpush1.xpose.msra.mxu0 0.0
        %2013 = vmatprep.subr.mxu0 0.0
        %2014 = vmatpush1.xpose.msra.mxu0 0.0
        %2015 = vmatprep.subr.mxu0 0.0
        %2016 = vmatpush1.xpose.msra.mxu0 0.0
        %2017 = vmatprep.subr.mxu0 0.0
        %2018 = vmatpush1.xpose.msra.mxu0 0.0
        %2019 = vmatprep.subr.mxu0 0.0
        %2020 = vmatpush1.xpose.msra.mxu0 0.0
        %2021 = vmatprep.subr.mxu0 0.0
        %2022 = vmatpush1.xpose.msra.mxu0 0.0
        %2023 = vmatprep.subr.mxu0 0.0
        %2024 = vmatpush1.xpose.msra.mxu0 0.0
        %2025 = vmatprep.subr.mxu0 0.0
        %2026 = vmatpush1.xpose.msra.mxu0 0.0
        %2027 = vmatprep.subr.mxu0 0.0
        %2028 = vmatpush1.xpose.msra.mxu0 0.0
        %2029 = vmatprep.subr.mxu0 0.0
        %2030 = vmatpush1.xpose.msra.mxu0 0.0
        %2031 = vmatprep.subr.mxu0 0.0
        %2032 = vmatpush1.xpose.msra.mxu0 0.0
        %2033 = vmatprep.mubr.f32.mxu0 0.0
        %2034 = vmatmul.mubr.f32.gmra.mrb[0].mxu0 %v1965
        %v2035 = vpop.f32.mrb[0].mxu0
        %v2036 = vadd.f32 0.0, %v2035
        %v2037 = vpop.f32.mrb[0].mxu0
        %2038 = vdwg.mxu0
        %2039 = vrot.lane.b32.xlu0 %v773, 104
        %v2040 = vpop.permute.xlu0 %2039
        %2041 = vrot.lane.b32.xlu0 %v857, 104
        %v2042 = vpop.permute.xlu0 %2041
        %v2043 = vsel %vm946, %v2040, 0
        %v2045 = vsel %vm946, %v2042, 0
        %2047 = vmatprep.subr.mxu0 0.0
        %2048 = vmatpush1.xpose.msra.mxu0 %v2045
        %2049 = vmatprep.subr.mxu0 0.0
        %2050 = vmatpush1.xpose.msra.mxu0 0.0
        %2051 = vmatprep.subr.mxu0 0.0
        %2052 = vmatpush1.xpose.msra.mxu0 0.0
        %2053 = vmatprep.subr.mxu0 0.0
        %2054 = vmatpush1.xpose.msra.mxu0 0.0
        %2055 = vmatprep.subr.mxu0 0.0
        %2056 = vmatpush1.xpose.msra.mxu0 0.0
        %2057 = vmatprep.subr.mxu0 0.0
        %2058 = vmatpush1.xpose.msra.mxu0 0.0
        %2059 = vmatprep.subr.mxu0 0.0
        %2060 = vmatpush1.xpose.msra.mxu0 0.0
        %2061 = vmatprep.subr.mxu0 0.0
        %2062 = vmatpush1.xpose.msra.mxu0 0.0
        %2063 = vmatprep.subr.mxu0 0.0
        %2064 = vmatpush1.xpose.msra.mxu0 0.0
        %2065 = vmatprep.subr.mxu0 0.0
        %2066 = vmatpush1.xpose.msra.mxu0 0.0
        %2067 = vmatprep.subr.mxu0 0.0
        %2068 = vmatpush1.xpose.msra.mxu0 0.0
        %2069 = vmatprep.subr.mxu0 0.0
        %2070 = vmatpush1.xpose.msra.mxu0 0.0
        %2071 = vmatprep.subr.mxu0 0.0
        %2072 = vmatpush1.xpose.msra.mxu0 0.0
        %2073 = vmatprep.subr.mxu0 0.0
        %2074 = vmatpush1.xpose.msra.mxu0 0.0
        %2075 = vmatprep.subr.mxu0 0.0
        %2076 = vmatpush1.xpose.msra.mxu0 0.0
        %2077 = vmatprep.subr.mxu0 0.0
        %2078 = vmatpush1.xpose.msra.mxu0 0.0
        %2079 = vmatprep.subr.mxu0 0.0
        %2080 = vmatpush1.xpose.msra.mxu0 0.0
        %2081 = vmatprep.subr.mxu0 0.0
        %2082 = vmatpush1.xpose.msra.mxu0 0.0
        %2083 = vmatprep.subr.mxu0 0.0
        %2084 = vmatpush1.xpose.msra.mxu0 0.0
        %2085 = vmatprep.subr.mxu0 0.0
        %2086 = vmatpush1.xpose.msra.mxu0 0.0
        %2087 = vmatprep.subr.mxu0 0.0
        %2088 = vmatpush1.xpose.msra.mxu0 0.0
        %2089 = vmatprep.subr.mxu0 0.0
        %2090 = vmatpush1.xpose.msra.mxu0 0.0
        %2091 = vmatprep.subr.mxu0 0.0
        %2092 = vmatpush1.xpose.msra.mxu0 0.0
        %2093 = vmatprep.subr.mxu0 0.0
        %2094 = vmatpush1.xpose.msra.mxu0 0.0
        %2095 = vmatprep.subr.mxu0 0.0
        %2096 = vmatpush1.xpose.msra.mxu0 0.0
        %2097 = vmatprep.subr.mxu0 0.0
        %2098 = vmatpush1.xpose.msra.mxu0 0.0
        %2099 = vmatprep.subr.mxu0 0.0
        %2100 = vmatpush1.xpose.msra.mxu0 0.0
        %2101 = vmatprep.subr.mxu0 0.0
        %2102 = vmatpush1.xpose.msra.mxu0 0.0
        %2103 = vmatprep.subr.mxu0 0.0
        %2104 = vmatpush1.xpose.msra.mxu0 0.0
        %2105 = vmatprep.subr.mxu0 0.0
        %2106 = vmatpush1.xpose.msra.mxu0 0.0
        %2107 = vmatprep.subr.mxu0 0.0
        %2108 = vmatpush1.xpose.msra.mxu0 0.0
        %2109 = vmatprep.subr.mxu0 0.0
        %2110 = vmatpush1.xpose.msra.mxu0 0.0
        %2111 = vmatprep.mubr.f32.mxu0 0.0
        %2112 = vmatmul.mubr.f32.gmra.mrb[0].mxu0 %v2043
        %v2113 = vpop.f32.mrb[0].mxu0
        %v2114 = vadd.f32 0.0, %v2113
        %v2115 = vpop.f32.mrb[0].mxu0
        %2116 = vdwg.mxu0
        %v2117 = vsel %vm946, %v2036, -inf
        %2118 = vmax.xlane.f32.xlu0 %v2117
        %v2119 = vpop.xlane.xlu0 %2118
        %v2120 = vsel %vm946, %v2114, -inf
        %2121 = vmax.xlane.f32.xlu0 %v2120
        %v2122 = vpop.xlane.xlu0 %2121
        %v2123 = vsub.f32 %v2036, %v2119
        %v2124 = vsub.f32 %v2114, %v2122
        %v2125 = vmul.f32 %v2123, 1.442695
        %v2126 = vpow.pop %v2125
        %v2127 = vmul.f32 %v2124, 1.442695
        %v2128 = vpow.pop %v2127
        %v2129 = vsel %vm946, %v2126, 0.0
        %2130 = vadd.xlane.f32.xlu0 %v2129
        %v2131 = vpop.xlane.xlu0 %2130
        %v2132 = vsel %vm946, %v2128, 0.0
        %2133 = vadd.xlane.f32.xlu0 %v2132
        %v2134 = vpop.xlane.xlu0 %2133
        %v2135 = vrcp.pop %v2131
        %v2136 = vrcp.pop %v2134
        %v2137 = vmul.f32 %v2126, %v2135
        %v2138 = vmul.f32 %v2128, %v2136
        %s2139 = scalar_lea.vmem %s660, 48 [#allocation13]
        %2140 = vst.msk [vmem:[%s2139] sm:$0xff] %vm946, %v2137
        %2141 = vst.msk [vmem:[%s2139 + $0x8] sm:$0xff] %vm946, %v2138
        %2142 = vrot.lane.b32.xlu0 %v938, 104
        %v2143 = vpop.permute.xlu0 %2142
        %v2146 = vsel %vm946, %v2137, 0
        %2148 = vmatprep.subr.mxu0 0.0
        %2149 = vmatpush1.msra.mxu0 %v2143
        %2150 = vmatprep.subr.mxu0 0.0
        %2151 = vmatpush1.msra.mxu0 0.0
        %2152 = vmatprep.subr.mxu0 0.0
        %2153 = vmatpush1.msra.mxu0 0.0
        %2154 = vmatprep.subr.mxu0 0.0
        %2155 = vmatpush1.msra.mxu0 0.0
        %2156 = vmatprep.subr.mxu0 0.0
        %2157 = vmatpush1.msra.mxu0 0.0
        %2158 = vmatprep.subr.mxu0 0.0
        %2159 = vmatpush1.msra.mxu0 0.0
        %2160 = vmatprep.subr.mxu0 0.0
        %2161 = vmatpush1.msra.mxu0 0.0
        %2162 = vmatprep.subr.mxu0 0.0
        %2163 = vmatpush1.msra.mxu0 0.0
        %2164 = vmatprep.subr.mxu0 0.0
        %2165 = vmatpush1.msra.mxu0 0.0
        %2166 = vmatprep.subr.mxu0 0.0
        %2167 = vmatpush1.msra.mxu0 0.0
        %2168 = vmatprep.subr.mxu0 0.0
        %2169 = vmatpush1.msra.mxu0 0.0
        %2170 = vmatprep.subr.mxu0 0.0
        %2171 = vmatpush1.msra.mxu0 0.0
        %2172 = vmatprep.subr.mxu0 0.0
        %2173 = vmatpush1.msra.mxu0 0.0
        %2174 = vmatprep.subr.mxu0 0.0
        %2175 = vmatpush1.msra.mxu0 0.0
        %2176 = vmatprep.subr.mxu0 0.0
        %2177 = vmatpush1.msra.mxu0 0.0
        %2178 = vmatprep.subr.mxu0 0.0
        %2179 = vmatpush1.msra.mxu0 0.0
        %2180 = vmatprep.subr.mxu0 0.0
        %2181 = vmatpush1.msra.mxu0 0.0
        %2182 = vmatprep.subr.mxu0 0.0
        %2183 = vmatpush1.msra.mxu0 0.0
        %2184 = vmatprep.subr.mxu0 0.0
        %2185 = vmatpush1.msra.mxu0 0.0
        %2186 = vmatprep.subr.mxu0 0.0
        %2187 = vmatpush1.msra.mxu0 0.0
        %2188 = vmatprep.subr.mxu0 0.0
        %2189 = vmatpush1.msra.mxu0 0.0
        %2190 = vmatprep.subr.mxu0 0.0
        %2191 = vmatpush1.msra.mxu0 0.0
        %2192 = vmatprep.subr.mxu0 0.0
        %2193 = vmatpush1.msra.mxu0 0.0
        %2194 = vmatprep.subr.mxu0 0.0
        %2195 = vmatpush1.msra.mxu0 0.0
        %2196 = vmatprep.subr.mxu0 0.0
        %2197 = vmatpush1.msra.mxu0 0.0
        %2198 = vmatprep.subr.mxu0 0.0
        %2199 = vmatpush1.msra.mxu0 0.0
        %2200 = vmatprep.subr.mxu0 0.0
        %2201 = vmatpush1.msra.mxu0 0.0
        %2202 = vmatprep.subr.mxu0 0.0
        %2203 = vmatpush1.msra.mxu0 0.0
        %2204 = vmatprep.subr.mxu0 0.0
        %2205 = vmatpush1.msra.mxu0 0.0
        %2206 = vmatprep.subr.mxu0 0.0
        %2207 = vmatpush1.msra.mxu0 0.0
        %2208 = vmatprep.subr.mxu0 0.0
        %2209 = vmatpush1.msra.mxu0 0.0
        %2210 = vmatprep.subr.mxu0 0.0
        %2211 = vmatpush1.msra.mxu0 0.0
        %2212 = vmatprep.mubr.f32.mxu0 0.0
        %2213 = vmatmul.mubr.f32.gmra.mrb[0].mxu0 %v2146
        %v2214 = vpop.f32.mrb[0].mxu0
        %v2215 = vadd.f32 0.0, %v2214
        %v2216 = vpop.f32.mrb[0].mxu0
        %2217 = vdwg.mxu0
        %2218 = vrot.lane.b32.xlu0 %v943, 104
        %v2219 = vpop.permute.xlu0 %2218
        %v2222 = vsel %vm946, %v2138, 0
        %2224 = vmatprep.subr.mxu0 0.0
        %2225 = vmatpush1.msra.mxu0 %v2219
        %2226 = vmatprep.subr.mxu0 0.0
        %2227 = vmatpush1.msra.mxu0 0.0
        %2228 = vmatprep.subr.mxu0 0.0
        %2229 = vmatpush1.msra.mxu0 0.0
        %2230 = vmatprep.subr.mxu0 0.0
        %2231 = vmatpush1.msra.mxu0 0.0
        %2232 = vmatprep.subr.mxu0 0.0
        %2233 = vmatpush1.msra.mxu0 0.0
        %2234 = vmatprep.subr.mxu0 0.0
        %2235 = vmatpush1.msra.mxu0 0.0
        %2236 = vmatprep.subr.mxu0 0.0
        %2237 = vmatpush1.msra.mxu0 0.0
        %2238 = vmatprep.subr.mxu0 0.0
        %2239 = vmatpush1.msra.mxu0 0.0
        %2240 = vmatprep.subr.mxu0 0.0
        %2241 = vmatpush1.msra.mxu0 0.0
        %2242 = vmatprep.subr.mxu0 0.0
        %2243 = vmatpush1.msra.mxu0 0.0
        %2244 = vmatprep.subr.mxu0 0.0
        %2245 = vmatpush1.msra.mxu0 0.0
        %2246 = vmatprep.subr.mxu0 0.0
        %2247 = vmatpush1.msra.mxu0 0.0
        %2248 = vmatprep.subr.mxu0 0.0
        %2249 = vmatpush1.msra.mxu0 0.0
        %2250 = vmatprep.subr.mxu0 0.0
        %2251 = vmatpush1.msra.mxu0 0.0
        %2252 = vmatprep.subr.mxu0 0.0
        %2253 = vmatpush1.msra.mxu0 0.0
        %2254 = vmatprep.subr.mxu0 0.0
        %2255 = vmatpush1.msra.mxu0 0.0
        %2256 = vmatprep.subr.mxu0 0.0
        %2257 = vmatpush1.msra.mxu0 0.0
        %2258 = vmatprep.subr.mxu0 0.0
        %2259 = vmatpush1.msra.mxu0 0.0
        %2260 = vmatprep.subr.mxu0 0.0
        %2261 = vmatpush1.msra.mxu0 0.0
        %2262 = vmatprep.subr.mxu0 0.0
        %2263 = vmatpush1.msra.mxu0 0.0
        %2264 = vmatprep.subr.mxu0 0.0
        %2265 = vmatpush1.msra.mxu0 0.0
        %2266 = vmatprep.subr.mxu0 0.0
        %2267 = vmatpush1.msra.mxu0 0.0
        %2268 = vmatprep.subr.mxu0 0.0
        %2269 = vmatpush1.msra.mxu0 0.0
        %2270 = vmatprep.subr.mxu0 0.0
        %2271 = vmatpush1.msra.mxu0 0.0
        %2272 = vmatprep.subr.mxu0 0.0
        %2273 = vmatpush1.msra.mxu0 0.0
        %2274 = vmatprep.subr.mxu0 0.0
        %2275 = vmatpush1.msra.mxu0 0.0
        %2276 = vmatprep.subr.mxu0 0.0
        %2277 = vmatpush1.msra.mxu0 0.0
        %2278 = vmatprep.subr.mxu0 0.0
        %2279 = vmatpush1.msra.mxu0 0.0
        %2280 = vmatprep.subr.mxu0 0.0
        %2281 = vmatpush1.msra.mxu0 0.0
        %2282 = vmatprep.subr.mxu0 0.0
        %2283 = vmatpush1.msra.mxu0 0.0
        %2284 = vmatprep.subr.mxu0 0.0
        %2285 = vmatpush1.msra.mxu0 0.0
        %2286 = vmatprep.subr.mxu0 0.0
        %2287 = vmatpush1.msra.mxu0 0.0
        %2288 = vmatprep.mubr.f32.mxu0 0.0
        %2289 = vmatmul.mubr.f32.gmra.mrb[0].mxu0 %v2222
        %v2290 = vpop.f32.mrb[0].mxu0
        %v2291 = vadd.f32 0.0, %v2290
        %v2292 = vpop.f32.mrb[0].mxu0
        %2293 = vdwg.mxu0
        %2296 = vrot.lane.b32.xlu0 %v2215, 24
        %v2297 = vpop.permute.xlu0 %2296
        %2298 = vrot.lane.b32.xlu0 %v2291, 24
        %v2299 = vpop.permute.xlu0 %2298
        %vm2302 = vcmask 261312
        %2303 = vst.msk [vmem:[#allocation2] sm:$0xff] %vm2302, %v2297
        %2304 = vst.msk [vmem:[#allocation2 + $0x8] sm:$0xff] %vm2302, %v2299
        %v2305 = vld [vmem:[#allocation2] sm:$0xff]
        %v2306 = vld [vmem:[#allocation2 + $0x8] sm:$0xff]
        %v2307 = vld [vmem:[%s583] sm:$0xff]
        %v2308 = vld [vmem:[%s583 + $0x8] sm:$0xff]
        %v2309 = vld [vmem:[%s583 + $0x10] sm:$0xff]
        %v2310 = vld [vmem:[%s583 + $0x18] sm:$0xff]
        %v2311 = vld [vmem:[%s673] sm:$0x1]
        %v2313 = vlaneseq
        %v2314 = vshrl.u32 %v2313, 7
        %v2315 = vsub.s32 0, %v2314
        %v2316 = vrot.slane %v2311, %v2315
        %v2319 = vsel %vm690, %v2305, 0
        %v2322 = vsel %vm690, %v2306, 0
        %2324 = vmatprep.subr.mxu0 0.0
        %2325 = vmatpush1.msra.mxu0 %v2307
        %2326 = vmatprep.subr.mxu0 0.0
        %2327 = vmatpush1.msra.mxu0 %v2308
        %2328 = vmatprep.subr.mxu0 0.0
        %2329 = vmatpush1.msra.mxu0 %v2309
        %2330 = vmatprep.subr.mxu0 0.0
        %2331 = vmatpush1.msra.mxu0 %v2310
        %2332 = vmatprep.subr.mxu0 0.0
        %2333 = vmatpush1.msra.mxu0 0.0
        %2334 = vmatprep.subr.mxu0 0.0
        %2335 = vmatpush1.msra.mxu0 0.0
        %2336 = vmatprep.subr.mxu0 0.0
        %2337 = vmatpush1.msra.mxu0 0.0
        %2338 = vmatprep.subr.mxu0 0.0
        %2339 = vmatpush1.msra.mxu0 0.0
        %2340 = vmatprep.subr.mxu0 0.0
        %2341 = vmatpush1.msra.mxu0 0.0
        %2342 = vmatprep.subr.mxu0 0.0
        %2343 = vmatpush1.msra.mxu0 0.0
        %2344 = vmatprep.subr.mxu0 0.0
        %2345 = vmatpush1.msra.mxu0 0.0
        %2346 = vmatprep.subr.mxu0 0.0
        %2347 = vmatpush1.msra.mxu0 0.0
        %2348 = vmatprep.subr.mxu0 0.0
        %2349 = vmatpush1.msra.mxu0 0.0
        %2350 = vmatprep.subr.mxu0 0.0
        %2351 = vmatpush1.msra.mxu0 0.0
        %2352 = vmatprep.subr.mxu0 0.0
        %2353 = vmatpush1.msra.mxu0 0.0
        %2354 = vmatprep.subr.mxu0 0.0
        %2355 = vmatpush1.msra.mxu0 0.0
        %2356 = vmatprep.subr.mxu0 0.0
        %2357 = vmatpush1.msra.mxu0 0.0
        %2358 = vmatprep.subr.mxu0 0.0
        %2359 = vmatpush1.msra.mxu0 0.0
        %2360 = vmatprep.subr.mxu0 0.0
        %2361 = vmatpush1.msra.mxu0 0.0
        %2362 = vmatprep.subr.mxu0 0.0
        %2363 = vmatpush1.msra.mxu0 0.0
        %2364 = vmatprep.subr.mxu0 0.0
        %2365 = vmatpush1.msra.mxu0 0.0
        %2366 = vmatprep.subr.mxu0 0.0
        %2367 = vmatpush1.msra.mxu0 0.0
        %2368 = vmatprep.subr.mxu0 0.0
        %2369 = vmatpush1.msra.mxu0 0.0
        %2370 = vmatprep.subr.mxu0 0.0
        %2371 = vmatpush1.msra.mxu0 0.0
        %2372 = vmatprep.subr.mxu0 0.0
        %2373 = vmatpush1.msra.mxu0 0.0
        %2374 = vmatprep.subr.mxu0 0.0
        %2375 = vmatpush1.msra.mxu0 0.0
        %2376 = vmatprep.subr.mxu0 0.0
        %2377 = vmatpush1.msra.mxu0 0.0
        %2378 = vmatprep.subr.mxu0 0.0
        %2379 = vmatpush1.msra.mxu0 0.0
        %2380 = vmatprep.subr.mxu0 0.0
        %2381 = vmatpush1.msra.mxu0 0.0
        %2382 = vmatprep.subr.mxu0 0.0
        %2383 = vmatpush1.msra.mxu0 0.0
        %2384 = vmatprep.subr.mxu0 0.0
        %2385 = vmatpush1.msra.mxu0 0.0
        %2386 = vmatprep.subr.mxu0 0.0
        %2387 = vmatpush1.msra.mxu0 0.0
        %2388 = vmatprep.mubr.f32.mxu0 0.0
        %2389 = vmatmul.mubr.f32.gmra.mrb[0].mxu0 %v2319
        %v2390 = vpop.f32.mrb[0].mxu0
        %v2391 = vadd.f32 %v2316, %v2390
        %v2392 = vpop.f32.mrb[0].mxu0
        %2393 = vmatprep.mubr.f32.mxu0 0.0
        %2394 = vmatmul.mubr.f32.gmra.mrb[0].mxu0 %v2322
        %v2395 = vpop.f32.mrb[0].mxu0
        %v2396 = vadd.f32 %v2316, %v2395
        %v2397 = vpop.f32.mrb[0].mxu0
        %2398 = vdwg.mxu0
        %v2399 = vadd.f32 %v2391, %v677
        %v2400 = vadd.f32 %v2396, %v678
        %v2401 = vsel %vm690, %v2399, 0.0
        %2402 = vadd.xlane.f32.xlu0 %v2401
        %v2403 = vpop.xlane.xlu0 %2402
        %v2404 = vsel %vm690, %v2400, 0.0
        %2405 = vadd.xlane.f32.xlu0 %v2404
        %v2406 = vpop.xlane.xlu0 %2405
        %v2407 = vrcp.pop 32.0
        %v2408 = vmul.f32 %v2403, %v2407
        %v2409 = vmul.f32 %v2406, %v2407
        %v2410 = vsub.f32 %v2399, %v2408
        %v2411 = vsub.f32 %v2400, %v2409
        %v2412 = vmul.f32 %v2410, %v2410
        %v2413 = vmul.f32 %v2411, %v2411
        %v2414 = vsel %vm690, %v2412, 0.0
        %2415 = vadd.xlane.f32.xlu0 %v2414
        %v2416 = vpop.xlane.xlu0 %2415
        %v2417 = vsel %vm690, %v2413, 0.0
        %2418 = vadd.xlane.f32.xlu0 %v2417
        %v2419 = vpop.xlane.xlu0 %2418
        %v2420 = vmul.f32 %v2416, %v2407
        %v2421 = vmul.f32 %v2419, %v2407
        %v2422 = vadd.f32 %v2420, 1e-05
        %v2423 = vadd.f32 %v2421, 1e-05
        %v2424 = vrsqrt.pop %v2422
        %v2425 = vrsqrt.pop %v2423
        %v2426 = vmul.f32 %v2410, %v2424
        %v2427 = vmul.f32 %v2411, %v2425
        %v2428 = vld [vmem:[%s9] sm:$0x1]
        %v2430 = vlaneseq
        %v2431 = vshrl.u32 %v2430, 7
        %v2432 = vsub.s32 0, %v2431
        %v2433 = vrot.slane %v2428, %v2432
        %v2435 = vmul.f32 %v2426, %v2433
        %v2436 = vmul.f32 %v2427, %v2433
        %v2437 = vld [vmem:[%s10] sm:$0x1]
        %v2439 = vlaneseq
        %v2440 = vshrl.u32 %v2439, 7
        %v2441 = vsub.s32 0, %v2440
        %v2442 = vrot.slane %v2437, %v2441
        %v2444 = vadd.f32 %v2435, %v2442
        %v2445 = vadd.f32 %v2436, %v2442
        %2446 = vst.msk [vmem:[%s653] sm:$0xff] %vm690, %v2444
        %2447 = vst.msk [vmem:[%s653 + $0x8] sm:$0xff] %vm690, %v2445
        %s2448 = sand.u32 %s339, 1
        %s2449 = scalar_lea.sflag [#allocation5], %s2448
        %s2450 = sand.u32 %s339, 1
        %s2451 = smul.addr %s2450, 16
        %s2452 = scalar_lea.vmem [#allocation12], %s2451
        %s2453 = sand.u32 %s367, 1
        %s2454 = scalar_lea.sflag [#allocation14], %s2453
        %s2455 = sand.u32 %s367, 1
        %s2456 = smul.addr %s2455, 64
        %s2457 = scalar_lea.vmem [#allocation13], %s2456
        // Predicated region
        $region85: #{_run_pallas.1} parent=63 // pred_check
          %p2458 = pneg %p349
        $region86: #{_run_pallas.1} parent=63 // pred_check_branch
          %2460 = sbr.rel (%p2458) target = $region88
        $region87: #{_run_pallas.1} parent=63 // pred_region
          %s2461 = smul.u32 2, %s44
          %s2463 = ssub.s32 256, 256
          %2464 = vsyncadd %s2449, %s2463
          %s2465 = smul.addr %s43, 2
          %s2466 = sadd.s32 %s2461, %s2465
          %s2467 = smul.addr %s2466, 128
          %s2468 = scalar_lea.hbm %s11, %s2467
          %s2469 = sshll.u32 %s2452, 4
          %s2470 = int_to_ptr.vmem [resolvable:$true] %s2469
          %2475 = dma.vmem_to_hbm [thread:$0]  %s2470, 256, %s2468, %s2449, 128, 128, 8
        $region88: #{_run_pallas.1} parent=63 // pred_fallthru
          _
        // Predicated region
        $region89: #{_run_pallas.1} parent=63 // pred_check
          %p2476 = pneg %p377
        $region90: #{_run_pallas.1} parent=63 // pred_check_branch
          %2478 = sbr.rel (%p2476) target = $region92
        $region91: #{_run_pallas.1} parent=63 // pred_region
          %s2479 = smul.u32 4, %s43
          %s2480 = smul.u32 2, %s44
          %s2482 = ssub.s32 1024, 1024
          %2483 = vsyncadd %s2454, %s2482
          %s2484 = smul.addr %s2479, 2
          %s2485 = sadd.s32 %s2480, %s2484
          %s2486 = smul.addr %s2485, 128
          %s2487 = scalar_lea.hbm %s12, %s2486
          %s2488 = sshll.u32 %s2457, 4
          %s2489 = int_to_ptr.vmem [resolvable:$true] %s2488
          %2494 = dma.vmem_to_hbm [thread:$0]  %s2489, 1024, %s2487, %s2454, 128, 128, 8
        $region92: #{_run_pallas.1} parent=63 // pred_fallthru
          _
      $region64: #{_run_pallas.1} parent=5 // pred_fallthru
        _
      %p2495 = scmp.le.s32.totalorder 2, %s34
      // Predicated region
      $region93: #{_run_pallas.1} parent=5 // pred_check
        %p2496 = pneg %p2495
      $region94: #{_run_pallas.1} parent=5 // pred_check_branch
        %2498 = sbr.rel (%p2496) target = $region96
      $region95: #{_run_pallas.1} parent=5 // pred_region
        %s2499 = ssub.s32 %s34, 2
        // Predicated region
        $region97: #{_run_pallas.1} parent=95 // pred_check
          %p2500 = pneg %p355
        $region98: #{_run_pallas.1} parent=95 // pred_check_branch
          %2502 = sbr.rel (%p2500) target = $region100
        $region99: #{_run_pallas.1} parent=95 // pred_region
          %s2503 = sand.u32 %s340, 1
          %s2504 = scalar_lea.sflag [#allocation5], %s2503
          %s2505 = sand.u32 %s340, 1
          %s2506 = smul.addr %s2505, 16
          %s2507 = scalar_lea.vmem [#allocation12], %s2506
          %2508 = dma.done %s2504, 256
        $region100: #{_run_pallas.1} parent=95 // pred_fallthru
          _
        // Predicated region
        $region101: #{_run_pallas.1} parent=95 // pred_check
          %p2509 = pneg %p383
        $region102: #{_run_pallas.1} parent=95 // pred_check_branch
          %2511 = sbr.rel (%p2509) target = $region104
        $region103: #{_run_pallas.1} parent=95 // pred_region
          %s2512 = sand.u32 %s368, 1
          %s2513 = scalar_lea.sflag [#allocation14], %s2512
          %s2514 = sand.u32 %s368, 1
          %s2515 = smul.addr %s2514, 64
          %s2516 = scalar_lea.vmem [#allocation13], %s2515
          %2517 = dma.done %s2513, 1024
        $region104: #{_run_pallas.1} parent=95 // pred_fallthru
          _
      $region96: #{_run_pallas.1} parent=5 // pred_fallthru
        _
    $region6: #{_run_pallas.1} parent=1 // loop_footer
      %s38 = sadd.s32 1, %s34
    $region7: #{_run_pallas.1} parent=1 // loop_footer_branch
      %33 = sbr.rel target = $region3
    $region8: #{_run_pallas.1} parent=1 // loop_exit
      _
    %2518 = vsyncpa [#allocation4], 1
    %s2519 = scalar_lea.sflag [#allocation4], 1
    %2520 = vsyncpa %s2519, 1
    %2521 = vsyncpa [#allocation7], 1
    %s2522 = scalar_lea.sflag [#allocation7], 1
    %2523 = vsyncpa %s2522, 1
    %2524 = vsyncpa [#allocation10], 1
    %s2525 = scalar_lea.sflag [#allocation10], 1
    %2526 = vsyncpa %s2525, 1
    %2527 = vsyncpa [#allocation5], 1
    %s2528 = scalar_lea.sflag [#allocation5], 1
    %2529 = vsyncpa %s2528, 1
    %2530 = vsyncpa [#allocation14], 1
    %s2531 = scalar_lea.sflag [#allocation14], 1
    %2532 = vsyncpa %s2531, 1

</llo_original>
